<compile_context>
chip_gen: v7x
topology: tpu7x:2x2x1
jax: 0.10.0
libtpu: 0.0.40
codegen_flags: <defaults>
</compile_context>

<pallas_src>
import jax
import jax.numpy as jnp
import numpy as np
from jax import lax
from jax.experimental import pallas as pl
from jax.experimental.pallas import tpu as pltpu


def vgae_kernel(a_ref, h0_ref, w_ext_ref, b_ext_ref, w_mu_ref, noise_ref, b_mu_ref,
                a_hat_ref, packed_ref):
    # Layouts (lane axis = batch):
    #   a_ref      : VMEM (N, N, Bt)   a_ref[j, i, b] = A[b, i, j]   (columns of A)
    #   h0_ref     : VMEM (Din, N, Bt) h0_ref[d, i, b] = h0[b, i, d]
    #   w_ext_ref  : SMEM (Din, Dout)
    #   b_ext_ref  : SMEM (1, Dout)
    #   w_mu_ref   : SMEM (1, Dout)
    #   noise_ref  : VMEM (N, 1)       per-node noise, broadcast over batch lanes
    #   b_mu_ref   : SMEM (1, 1)
    #   a_hat_ref  : VMEM (N*N, Bt)    row i*N + j = sigmoid(lat_i * lat_j)
    #   packed_ref : VMEM (3*N, Bt)    rows [0,N)=x_mu, [N,2N)=x_log_sigma, [2N,3N)=latent
    n = a_ref.shape[0]
    din = h0_ref.shape[0]
    dout = w_ext_ref.shape[1]

    # ---- Symmetric normalization; self-loop folded analytically (no identity built).
    a_cols = [a_ref[j] for j in range(n)]          # N slabs of (N, Bt): column j of A
    deg = a_cols[0]
    for j in range(1, n):
        deg = deg + a_cols[j]
    deg = deg + 1.0                                # + self loop
    d = lax.rsqrt(deg)                             # (N, Bt)
    inv_deg = d * d                                # diagonal of A_norm (self-loop term)

    # Normalized off-diagonal columns: col_j[i, b] = d[i,b] * A[b,i,j] * d[j,b].
    norm_cols = [d * a_cols[j] * d[j:j + 1, :] for j in range(n)]

    def propagate(h):
        # (A_norm @ h) for one feature slab h: (N, Bt) -> (N, Bt). Pure VPU FMAs.
        y = inv_deg * h
        for j in range(n):
            y = y + norm_cols[j] * h[j:j + 1, :]
        return y

    # ---- GCN layer: relu(conv_external(A_norm @ h0)), kept as per-feature slabs.
    xh = [propagate(h0_ref[dd]) for dd in range(din)]            # Din x (N, Bt)

    x = []
    for e in range(dout):
        acc = xh[0] * w_ext_ref[0, e]
        for dd in range(1, din):
            acc = acc + xh[dd] * w_ext_ref[dd, e]
        x.append(jnp.maximum(acc + b_ext_ref[0, e], 0.0))        # Dout x (N, Bt)

    b_mu = b_mu_ref[0, 0]

    # ---- x_mu = conv_mu(x)   (PyTorch overwrites the A_norm@x result here).
    x_mu = x[0] * w_mu_ref[0, 0]
    for e in range(1, dout):
        x_mu = x_mu + x[e] * w_mu_ref[0, e]
    x_mu = x_mu + b_mu                                           # (N, Bt)

    # ---- x_log_sigma = conv_mu(A_norm @ x)   (PyTorch reuses conv_mu here).
    x_ls = propagate(x[0]) * w_mu_ref[0, 0]
    for e in range(1, dout):
        x_ls = x_ls + propagate(x[e]) * w_mu_ref[0, e]
    x_ls = x_ls + b_mu                                           # (N, Bt)

    # ---- Reparameterization; per-node noise shared across all batch lanes.
    lat = x_mu + noise_ref[...] * jnp.exp(x_ls)                  # (N, Bt)

    # ---- Decoder: sigmoid(lat lat^T) as N sublane-broadcast outer-product rows,
    #      concatenated into a single lane-dense (N*N, Bt) store.
    rows = [jax.nn.sigmoid(lat[i:i + 1, :] * lat) for i in range(n)]
    a_hat_ref[...] = jnp.concatenate(rows, axis=0)

    # ---- Single lane-dense store of the small outputs.
    packed_ref[...] = jnp.concatenate([x_mu, x_ls, lat], axis=0)


def _pick_block_b(B):
    """Lane (batch) tile. Fewest, fattest steps; sub-B blocks must be multiples of 128."""
    if B <= 256 or B % 128 != 0:
        return B                               # one fat step (single-TC v5e/v6e friendly)
    half = B // 2
    if half % 128 == 0 and half <= 4096:
        return half                            # 2 parallel steps: shards across v7x's 2 TCs
    for cand in range(4096, 127, -128):        # largest x128 divisor <= 4096 graphs/step
        if B % cand == 0:
            return cand
    return B


def my_model_forward(A, h0, w_ext, b_ext, w_mu, b_mu, noise, block_b=None):
    """A: (B,N,N), h0: (B,N,Din). Weights in (in, out) layout:
    w_ext (Din,Dout), b_ext (Dout,), w_mu (Dout,1), b_mu (1,), noise (Dout,1)."""
    B, N, _ = A.shape
    Din = h0.shape[-1]
    Dout = w_ext.shape[-1]
    assert Dout == N, "broadcast of randn(dim_output, 1) requires dim_output == n"

    bb = _pick_block_b(B) if block_b is None else block_b
    assert B % bb == 0

    # Batch-on-lanes layouts (lane axis = batch; graph/feature axes on sublanes/major).
    A_in = jnp.transpose(A, (2, 1, 0))          # (N_j, N_i, B): A_in[j,i,b] = A[b,i,j]
    h0_in = jnp.transpose(h0, (2, 1, 0))        # (Din, N, B):  h0_in[d,i,b] = h0[b,i,d]

    w_ext_s = w_ext.reshape(Din, Dout)          # SMEM scalar-read weights
    b_ext_s = b_ext.reshape(1, Dout)
    w_mu_s = w_mu.reshape(1, Dout)
    b_mu_s = b_mu.reshape(1, 1)
    noise_c = noise.reshape(N, 1)               # per-node noise column

    out_shapes = (
        jax.ShapeDtypeStruct((N * N, B), jnp.float32),   # A_hat, flat (i*N+j, b)
        jax.ShapeDtypeStruct((3 * N, B), jnp.float32),   # x_mu / x_log_sigma / latent
    )

    # Advisory cost estimate for the XLA scheduler.
    flops = B * (3 * N * N + 2 * N * N * (Din + Dout) + 2 * N * Din * Dout
                 + 4 * N * Dout + 2 * N + N * N)
    transcendentals = B * (N * N + 2 * N)                # sigmoid + exp + rsqrt
    bytes_accessed = 4 * (2 * B * N * N + B * N * Din + 3 * B * N
                          + Din * Dout + 2 * Dout + N + 1)

    # Derive VMEM limit from the block size (2x IO double-buffer + slab intermediates).
    block_bytes = 4 * bb * (2 * N * N + Din * N + 3 * N)
    vmem_limit = int(max(4 * 1024 * 1024, min(64 * 1024 * 1024, 6 * block_bytes)))

    smem = pltpu.MemorySpace.SMEM
    a_hat_slab, packed = pl.pallas_call(
        vgae_kernel,
        out_shape=out_shapes,
        grid_spec=pltpu.PrefetchScalarGridSpec(
            num_scalar_prefetch=0,
            grid=(B // bb,),
            in_specs=[
                pl.BlockSpec((N, N, bb), lambda i: (0, 0, i)),
                pl.BlockSpec((Din, N, bb), lambda i: (0, 0, i)),
                pl.BlockSpec(memory_space=smem),          # w_ext
                pl.BlockSpec(memory_space=smem),          # b_ext
                pl.BlockSpec(memory_space=smem),          # w_mu
                pl.BlockSpec((N, 1), lambda i: (0, 0)),   # noise (VMEM column)
                pl.BlockSpec(memory_space=smem),          # b_mu
            ],
            out_specs=[
                pl.BlockSpec((N * N, bb), lambda i: (0, i)),
                pl.BlockSpec((3 * N, bb), lambda i: (0, i)),
            ],
        ),
        compiler_params=pltpu.CompilerParams(
            dimension_semantics=("parallel",),
            vmem_limit_bytes=vmem_limit,
        ),
        cost_estimate=pl.CostEstimate(
            flops=flops, transcendentals=transcendentals,
            bytes_accessed=bytes_accessed),
    )(A_in, h0_in, w_ext_s, b_ext_s, w_mu_s, noise_c, b_mu_s)

    # Pure-glue unpacking back to the PyTorch output layouts.
    a_hat_flat = jnp.transpose(a_hat_slab, (1, 0))                   # (B, N*N)
    a_hat = a_hat_flat.reshape(B, N, N)
    x_mu = jnp.transpose(packed[0:N, :], (1, 0))[:, :, None]         # (B, N, 1)
    x_ls = jnp.transpose(packed[N:2 * N, :], (1, 0))[:, :, None]     # (B, N, 1)
    lat = jnp.transpose(packed[2 * N:3 * N, :], (1, 0))[:, :, None]  # (B, N, 1)
    return a_hat_flat, a_hat, x_mu, x_ls, lat


def _ref_forward(A, h0, w_ext, b_ext, w_mu, b_mu, noise):
    """Pure-JAX reference that mirrors the PyTorch forward literally."""
    B, N, _ = A.shape
    Dout = w_ext.shape[-1]
    eye = jnp.eye(N, dtype=A.dtype)
    Ai = A + eye
    d = 1.0 / jnp.sqrt(Ai.sum(axis=2))
    A_norm = d[:, :, None] * Ai * d[:, None, :]
    x = A_norm @ h0
    x = jnp.maximum(x @ w_ext + b_ext, 0.0)
    w_mu_col = w_mu.reshape(Dout, 1)
    x_mu = x @ w_mu_col + b_mu
    x_ls = (A_norm @ x) @ w_mu_col + b_mu
    lat = x_mu + noise.reshape(N, 1) * jnp.exp(x_ls)
    a_hat = jax.nn.sigmoid(lat @ jnp.transpose(lat, (0, 2, 1)))
    return a_hat.reshape(B, -1), a_hat, x_mu, x_ls, lat


if __name__ == "__main__":
    # Small shapes consistent with the module: n nodes == dim_output (required by its broadcast).
    B, N, Din, Dout = 2, 8, 4, 8

    key = jax.random.PRNGKey(0)
    k_a, k_h, k_we, k_be, k_wm, k_bm, k_noise = jax.random.split(key, 7)

    # Synthetic symmetric 0/1 adjacency (zero diagonal), float32.
    raw = (jax.random.uniform(k_a, (B, N, N)) < 0.3).astype(jnp.float32)
    A = jnp.clip(raw + jnp.transpose(raw, (0, 2, 1)), 0.0, 1.0)
    A = A * (1.0 - jnp.eye(N, dtype=jnp.float32))

    h0 = jax.random.normal(k_h, (B, N, Din), dtype=jnp.float32)

    # Deterministic synthetic parameters (PyTorch: conv_external (Dout,Din), conv_mu (1,Dout));
    # passed transposed as (in, out).  conv_log_sigma is unused in the PyTorch forward: omitted.
    w_ext = 0.3 * jax.random.normal(k_we, (Din, Dout), dtype=jnp.float32)
    b_ext = 0.1 * jax.random.normal(k_be, (Dout,), dtype=jnp.float32)
    w_mu = 0.3 * jax.random.normal(k_wm, (Dout, 1), dtype=jnp.float32)
    b_mu = 0.1 * jax.random.normal(k_bm, (1,), dtype=jnp.float32)

    # torch.randn(dim_output, 1) equivalent, fixed for determinism.
    noise = jax.random.normal(k_noise, (Dout, 1), dtype=jnp.float32)

    outs = my_model_forward(A, h0, w_ext, b_ext, w_mu, b_mu, noise)
    outs = jax.block_until_ready(outs)

    a_hat_flat, a_hat, x_mu, x_ls, lat = outs
    assert a_hat_flat.shape == (B, N * N)
    assert a_hat.shape == (B, N, N)
    assert x_mu.shape == (B, N, 1)
    assert x_ls.shape == (B, N, 1)
    assert lat.shape == (B, N, 1)

    refs = _ref_forward(A, h0, w_ext, b_ext, w_mu, b_mu, noise)
    for got, want in zip(outs, refs):
        assert got.shape == want.shape, (got.shape, want.shape)
        np.testing.assert_allclose(np.asarray(got), np.asarray(want),
                                   rtol=1e-3, atol=1e-3)
    print("KERNEL_OK")
</pallas_src>

<mosaic_0001>
module attributes {stable_mosaic.version = 11 : i64} {
  func.func @vgae_kernel(%arg0: i32, %arg1: memref<8x8x2xf32, #tpu.memory_space<vmem>>, %arg2: memref<4x8x2xf32, #tpu.memory_space<vmem>>, %arg3: memref<4x8xf32, #tpu.memory_space<smem>>, %arg4: memref<1x8xf32, #tpu.memory_space<smem>>, %arg5: memref<1x8xf32, #tpu.memory_space<smem>>, %arg6: memref<8x1xf32, #tpu.memory_space<vmem>>, %arg7: memref<1x1xf32, #tpu.memory_space<smem>>, %arg8: memref<64x2xf32, #tpu.memory_space<vmem>>, %arg9: memref<24x2xf32, #tpu.memory_space<vmem>>) attributes {dimension_semantics = [#tpu.dimension_semantics<parallel>], iteration_bounds = array<i64: 1>, scalar_prefetch = 0 : i64, scratch_operands = 0 : i64, tpu.core_type = #tpu.core_type<tc>, window_params = [{transform_indices = @transform_0, window_bounds = array<i64: 8, 8, 2>}, {transform_indices = @transform_1, window_bounds = array<i64: 4, 8, 2>}, {transform_indices = @transform_2, window_bounds = array<i64: 4, 8>}, {transform_indices = @transform_3, window_bounds = array<i64: 1, 8>}, {transform_indices = @transform_4, window_bounds = array<i64: 1, 8>}, {pipeline_mode = #tpu.pipeline_mode<synchronous>, transform_indices = @transform_5, window_bounds = array<i64: 8, 1>}, {transform_indices = @transform_6, window_bounds = array<i64: 1, 1>}, {transform_indices = @transform_7, window_bounds = array<i64: 64, 2>}, {transform_indices = @transform_8, window_bounds = array<i64: 24, 2>}]} {
    %c0 = arith.constant 0 : index
    %c0_0 = arith.constant 0 : index
    %c0_1 = arith.constant 0 : index
    %0 = vector.load %arg1[%c0, %c0_0, %c0_1] : memref<8x8x2xf32, #tpu.memory_space<vmem>>, vector<1x8x2xf32>
    %1 = vector.shape_cast %0 : vector<1x8x2xf32> to vector<8x2xf32>
    %c1 = arith.constant 1 : index
    %c0_2 = arith.constant 0 : index
    %c0_3 = arith.constant 0 : index
    %2 = vector.load %arg1[%c1, %c0_2, %c0_3] : memref<8x8x2xf32, #tpu.memory_space<vmem>>, vector<1x8x2xf32>
    %3 = vector.shape_cast %2 : vector<1x8x2xf32> to vector<8x2xf32>
    %c2 = arith.constant 2 : index
    %c0_4 = arith.constant 0 : index
    %c0_5 = arith.constant 0 : index
    %4 = vector.load %arg1[%c2, %c0_4, %c0_5] : memref<8x8x2xf32, #tpu.memory_space<vmem>>, vector<1x8x2xf32>
    %5 = vector.shape_cast %4 : vector<1x8x2xf32> to vector<8x2xf32>
    %c3 = arith.constant 3 : index
    %c0_6 = arith.constant 0 : index
    %c0_7 = arith.constant 0 : index
    %6 = vector.load %arg1[%c3, %c0_6, %c0_7] : memref<8x8x2xf32, #tpu.memory_space<vmem>>, vector<1x8x2xf32>
    %7 = vector.shape_cast %6 : vector<1x8x2xf32> to vector<8x2xf32>
    %c4 = arith.constant 4 : index
    %c0_8 = arith.constant 0 : index
    %c0_9 = arith.constant 0 : index
    %8 = vector.load %arg1[%c4, %c0_8, %c0_9] : memref<8x8x2xf32, #tpu.memory_space<vmem>>, vector<1x8x2xf32>
    %9 = vector.shape_cast %8 : vector<1x8x2xf32> to vector<8x2xf32>
    %c5 = arith.constant 5 : index
    %c0_10 = arith.constant 0 : index
    %c0_11 = arith.constant 0 : index
    %10 = vector.load %arg1[%c5, %c0_10, %c0_11] : memref<8x8x2xf32, #tpu.memory_space<vmem>>, vector<1x8x2xf32>
    %11 = vector.shape_cast %10 : vector<1x8x2xf32> to vector<8x2xf32>
    %c6 = arith.constant 6 : index
    %c0_12 = arith.constant 0 : index
    %c0_13 = arith.constant 0 : index
    %12 = vector.load %arg1[%c6, %c0_12, %c0_13] : memref<8x8x2xf32, #tpu.memory_space<vmem>>, vector<1x8x2xf32>
    %13 = vector.shape_cast %12 : vector<1x8x2xf32> to vector<8x2xf32>
    %c7 = arith.constant 7 : index
    %c0_14 = arith.constant 0 : index
    %c0_15 = arith.constant 0 : index
    %14 = vector.load %arg1[%c7, %c0_14, %c0_15] : memref<8x8x2xf32, #tpu.memory_space<vmem>>, vector<1x8x2xf32>
    %15 = vector.shape_cast %14 : vector<1x8x2xf32> to vector<8x2xf32>
    %16 = arith.addf %1, %3 : vector<8x2xf32>
    %17 = arith.addf %16, %5 : vector<8x2xf32>
    %18 = arith.addf %17, %7 : vector<8x2xf32>
    %19 = arith.addf %18, %9 : vector<8x2xf32>
    %20 = arith.addf %19, %11 : vector<8x2xf32>
    %21 = arith.addf %20, %13 : vector<8x2xf32>
    %22 = arith.addf %21, %15 : vector<8x2xf32>
    %cst = arith.constant 1.000000e+00 : f32
    %23 = vector.broadcast %cst : f32 to vector<8x2xf32>
    %24 = arith.addf %22, %23 : vector<8x2xf32>
    %25 = math.rsqrt %24 : vector<8x2xf32>
    %26 = arith.mulf %25, %25 : vector<8x2xf32>
    %27 = arith.mulf %25, %1 : vector<8x2xf32>
    %28 = vector.extract_strided_slice %25 {offsets = [0, 0], sizes = [1, 2], strides = [1, 1]} : vector<8x2xf32> to vector<1x2xf32>
    %29 = vector.broadcast %28 : vector<1x2xf32> to vector<8x2xf32>
    %30 = arith.mulf %27, %29 : vector<8x2xf32>
    %31 = arith.mulf %25, %3 : vector<8x2xf32>
    %32 = vector.extract_strided_slice %25 {offsets = [1, 0], sizes = [1, 2], strides = [1, 1]} : vector<8x2xf32> to vector<1x2xf32>
    %33 = vector.broadcast %32 : vector<1x2xf32> to vector<8x2xf32>
    %34 = arith.mulf %31, %33 : vector<8x2xf32>
    %35 = arith.mulf %25, %5 : vector<8x2xf32>
    %36 = vector.extract_strided_slice %25 {offsets = [2, 0], sizes = [1, 2], strides = [1, 1]} : vector<8x2xf32> to vector<1x2xf32>
    %37 = vector.broadcast %36 : vector<1x2xf32> to vector<8x2xf32>
    %38 = arith.mulf %35, %37 : vector<8x2xf32>
    %39 = arith.mulf %25, %7 : vector<8x2xf32>
    %40 = vector.extract_strided_slice %25 {offsets = [3, 0], sizes = [1, 2], strides = [1, 1]} : vector<8x2xf32> to vector<1x2xf32>
    %41 = vector.broadcast %40 : vector<1x2xf32> to vector<8x2xf32>
    %42 = arith.mulf %39, %41 : vector<8x2xf32>
    %43 = arith.mulf %25, %9 : vector<8x2xf32>
    %44 = vector.extract_strided_slice %25 {offsets = [4, 0], sizes = [1, 2], strides = [1, 1]} : vector<8x2xf32> to vector<1x2xf32>
    %45 = vector.broadcast %44 : vector<1x2xf32> to vector<8x2xf32>
    %46 = arith.mulf %43, %45 : vector<8x2xf32>
    %47 = arith.mulf %25, %11 : vector<8x2xf32>
    %48 = vector.extract_strided_slice %25 {offsets = [5, 0], sizes = [1, 2], strides = [1, 1]} : vector<8x2xf32> to vector<1x2xf32>
    %49 = vector.broadcast %48 : vector<1x2xf32> to vector<8x2xf32>
    %50 = arith.mulf %47, %49 : vector<8x2xf32>
    %51 = arith.mulf %25, %13 : vector<8x2xf32>
    %52 = vector.extract_strided_slice %25 {offsets = [6, 0], sizes = [1, 2], strides = [1, 1]} : vector<8x2xf32> to vector<1x2xf32>
    %53 = vector.broadcast %52 : vector<1x2xf32> to vector<8x2xf32>
    %54 = arith.mulf %51, %53 : vector<8x2xf32>
    %55 = arith.mulf %25, %15 : vector<8x2xf32>
    %56 = vector.extract_strided_slice %25 {offsets = [7, 0], sizes = [1, 2], strides = [1, 1]} : vector<8x2xf32> to vector<1x2xf32>
    %57 = vector.broadcast %56 : vector<1x2xf32> to vector<8x2xf32>
    %58 = arith.mulf %55, %57 : vector<8x2xf32>
    %c0_16 = arith.constant 0 : index
    %c0_17 = arith.constant 0 : index
    %c0_18 = arith.constant 0 : index
    %59 = vector.load %arg2[%c0_16, %c0_17, %c0_18] : memref<4x8x2xf32, #tpu.memory_space<vmem>>, vector<1x8x2xf32>
    %60 = vector.shape_cast %59 : vector<1x8x2xf32> to vector<8x2xf32>
    %61 = arith.mulf %26, %60 : vector<8x2xf32>
    %62 = vector.extract_strided_slice %60 {offsets = [0, 0], sizes = [1, 2], strides = [1, 1]} : vector<8x2xf32> to vector<1x2xf32>
    %63 = vector.broadcast %62 : vector<1x2xf32> to vector<8x2xf32>
    %64 = arith.mulf %30, %63 : vector<8x2xf32>
    %65 = arith.addf %61, %64 : vector<8x2xf32>
    %66 = vector.extract_strided_slice %60 {offsets = [1, 0], sizes = [1, 2], strides = [1, 1]} : vector<8x2xf32> to vector<1x2xf32>
    %67 = vector.broadcast %66 : vector<1x2xf32> to vector<8x2xf32>
    %68 = arith.mulf %34, %67 : vector<8x2xf32>
    %69 = arith.addf %65, %68 : vector<8x2xf32>
    %70 = vector.extract_strided_slice %60 {offsets = [2, 0], sizes = [1, 2], strides = [1, 1]} : vector<8x2xf32> to vector<1x2xf32>
    %71 = vector.broadcast %70 : vector<1x2xf32> to vector<8x2xf32>
    %72 = arith.mulf %38, %71 : vector<8x2xf32>
    %73 = arith.addf %69, %72 : vector<8x2xf32>
    %74 = vector.extract_strided_slice %60 {offsets = [3, 0], sizes = [1, 2], strides = [1, 1]} : vector<8x2xf32> to vector<1x2xf32>
    %75 = vector.broadcast %74 : vector<1x2xf32> to vector<8x2xf32>
    %76 = arith.mulf %42, %75 : vector<8x2xf32>
    %77 = arith.addf %73, %76 : vector<8x2xf32>
    %78 = vector.extract_strided_slice %60 {offsets = [4, 0], sizes = [1, 2], strides = [1, 1]} : vector<8x2xf32> to vector<1x2xf32>
    %79 = vector.broadcast %78 : vector<1x2xf32> to vector<8x2xf32>
    %80 = arith.mulf %46, %79 : vector<8x2xf32>
    %81 = arith.addf %77, %80 : vector<8x2xf32>
    %82 = vector.extract_strided_slice %60 {offsets = [5, 0], sizes = [1, 2], strides = [1, 1]} : vector<8x2xf32> to vector<1x2xf32>
    %83 = vector.broadcast %82 : vector<1x2xf32> to vector<8x2xf32>
    %84 = arith.mulf %50, %83 : vector<8x2xf32>
    %85 = arith.addf %81, %84 : vector<8x2xf32>
    %86 = vector.extract_strided_slice %60 {offsets = [6, 0], sizes = [1, 2], strides = [1, 1]} : vector<8x2xf32> to vector<1x2xf32>
    %87 = vector.broadcast %86 : vector<1x2xf32> to vector<8x2xf32>
    %88 = arith.mulf %54, %87 : vector<8x2xf32>
    %89 = arith.addf %85, %88 : vector<8x2xf32>
    %90 = vector.extract_strided_slice %60 {offsets = [7, 0], sizes = [1, 2], strides = [1, 1]} : vector<8x2xf32> to vector<1x2xf32>
    %91 = vector.broadcast %90 : vector<1x2xf32> to vector<8x2xf32>
    %92 = arith.mulf %58, %91 : vector<8x2xf32>
    %93 = arith.addf %89, %92 : vector<8x2xf32>
    %c1_19 = arith.constant 1 : index
    %c0_20 = arith.constant 0 : index
    %c0_21 = arith.constant 0 : index
    %94 = vector.load %arg2[%c1_19, %c0_20, %c0_21] : memref<4x8x2xf32, #tpu.memory_space<vmem>>, vector<1x8x2xf32>
    %95 = vector.shape_cast %94 : vector<1x8x2xf32> to vector<8x2xf32>
    %96 = arith.mulf %26, %95 : vector<8x2xf32>
    %97 = vector.extract_strided_slice %95 {offsets = [0, 0], sizes = [1, 2], strides = [1, 1]} : vector<8x2xf32> to vector<1x2xf32>
    %98 = vector.broadcast %97 : vector<1x2xf32> to vector<8x2xf32>
    %99 = arith.mulf %30, %98 : vector<8x2xf32>
    %100 = arith.addf %96, %99 : vector<8x2xf32>
    %101 = vector.extract_strided_slice %95 {offsets = [1, 0], sizes = [1, 2], strides = [1, 1]} : vector<8x2xf32> to vector<1x2xf32>
    %102 = vector.broadcast %101 : vector<1x2xf32> to vector<8x2xf32>
    %103 = arith.mulf %34, %102 : vector<8x2xf32>
    %104 = arith.addf %100, %103 : vector<8x2xf32>
    %105 = vector.extract_strided_slice %95 {offsets = [2, 0], sizes = [1, 2], strides = [1, 1]} : vector<8x2xf32> to vector<1x2xf32>
    %106 = vector.broadcast %105 : vector<1x2xf32> to vector<8x2xf32>
    %107 = arith.mulf %38, %106 : vector<8x2xf32>
    %108 = arith.addf %104, %107 : vector<8x2xf32>
    %109 = vector.extract_strided_slice %95 {offsets = [3, 0], sizes = [1, 2], strides = [1, 1]} : vector<8x2xf32> to vector<1x2xf32>
    %110 = vector.broadcast %109 : vector<1x2xf32> to vector<8x2xf32>
    %111 = arith.mulf %42, %110 : vector<8x2xf32>
    %112 = arith.addf %108, %111 : vector<8x2xf32>
    %113 = vector.extract_strided_slice %95 {offsets = [4, 0], sizes = [1, 2], strides = [1, 1]} : vector<8x2xf32> to vector<1x2xf32>
    %114 = vector.broadcast %113 : vector<1x2xf32> to vector<8x2xf32>
    %115 = arith.mulf %46, %114 : vector<8x2xf32>
    %116 = arith.addf %112, %115 : vector<8x2xf32>
    %117 = vector.extract_strided_slice %95 {offsets = [5, 0], sizes = [1, 2], strides = [1, 1]} : vector<8x2xf32> to vector<1x2xf32>
    %118 = vector.broadcast %117 : vector<1x2xf32> to vector<8x2xf32>
    %119 = arith.mulf %50, %118 : vector<8x2xf32>
    %120 = arith.addf %116, %119 : vector<8x2xf32>
    %121 = vector.extract_strided_slice %95 {offsets = [6, 0], sizes = [1, 2], strides = [1, 1]} : vector<8x2xf32> to vector<1x2xf32>
    %122 = vector.broadcast %121 : vector<1x2xf32> to vector<8x2xf32>
    %123 = arith.mulf %54, %122 : vector<8x2xf32>
    %124 = arith.addf %120, %123 : vector<8x2xf32>
    %125 = vector.extract_strided_slice %95 {offsets = [7, 0], sizes = [1, 2], strides = [1, 1]} : vector<8x2xf32> to vector<1x2xf32>
    %126 = vector.broadcast %125 : vector<1x2xf32> to vector<8x2xf32>
    %127 = arith.mulf %58, %126 : vector<8x2xf32>
    %128 = arith.addf %124, %127 : vector<8x2xf32>
    %c2_22 = arith.constant 2 : index
    %c0_23 = arith.constant 0 : index
    %c0_24 = arith.constant 0 : index
    %129 = vector.load %arg2[%c2_22, %c0_23, %c0_24] : memref<4x8x2xf32, #tpu.memory_space<vmem>>, vector<1x8x2xf32>
    %130 = vector.shape_cast %129 : vector<1x8x2xf32> to vector<8x2xf32>
    %131 = arith.mulf %26, %130 : vector<8x2xf32>
    %132 = vector.extract_strided_slice %130 {offsets = [0, 0], sizes = [1, 2], strides = [1, 1]} : vector<8x2xf32> to vector<1x2xf32>
    %133 = vector.broadcast %132 : vector<1x2xf32> to vector<8x2xf32>
    %134 = arith.mulf %30, %133 : vector<8x2xf32>
    %135 = arith.addf %131, %134 : vector<8x2xf32>
    %136 = vector.extract_strided_slice %130 {offsets = [1, 0], sizes = [1, 2], strides = [1, 1]} : vector<8x2xf32> to vector<1x2xf32>
    %137 = vector.broadcast %136 : vector<1x2xf32> to vector<8x2xf32>
    %138 = arith.mulf %34, %137 : vector<8x2xf32>
    %139 = arith.addf %135, %138 : vector<8x2xf32>
    %140 = vector.extract_strided_slice %130 {offsets = [2, 0], sizes = [1, 2], strides = [1, 1]} : vector<8x2xf32> to vector<1x2xf32>
    %141 = vector.broadcast %140 : vector<1x2xf32> to vector<8x2xf32>
    %142 = arith.mulf %38, %141 : vector<8x2xf32>
    %143 = arith.addf %139, %142 : vector<8x2xf32>
    %144 = vector.extract_strided_slice %130 {offsets = [3, 0], sizes = [1, 2], strides = [1, 1]} : vector<8x2xf32> to vector<1x2xf32>
    %145 = vector.broadcast %144 : vector<1x2xf32> to vector<8x2xf32>
    %146 = arith.mulf %42, %145 : vector<8x2xf32>
    %147 = arith.addf %143, %146 : vector<8x2xf32>
    %148 = vector.extract_strided_slice %130 {offsets = [4, 0], sizes = [1, 2], strides = [1, 1]} : vector<8x2xf32> to vector<1x2xf32>
    %149 = vector.broadcast %148 : vector<1x2xf32> to vector<8x2xf32>
    %150 = arith.mulf %46, %149 : vector<8x2xf32>
    %151 = arith.addf %147, %150 : vector<8x2xf32>
    %152 = vector.extract_strided_slice %130 {offsets = [5, 0], sizes = [1, 2], strides = [1, 1]} : vector<8x2xf32> to vector<1x2xf32>
    %153 = vector.broadcast %152 : vector<1x2xf32> to vector<8x2xf32>
    %154 = arith.mulf %50, %153 : vector<8x2xf32>
    %155 = arith.addf %151, %154 : vector<8x2xf32>
    %156 = vector.extract_strided_slice %130 {offsets = [6, 0], sizes = [1, 2], strides = [1, 1]} : vector<8x2xf32> to vector<1x2xf32>
    %157 = vector.broadcast %156 : vector<1x2xf32> to vector<8x2xf32>
    %158 = arith.mulf %54, %157 : vector<8x2xf32>
    %159 = arith.addf %155, %158 : vector<8x2xf32>
    %160 = vector.extract_strided_slice %130 {offsets = [7, 0], sizes = [1, 2], strides = [1, 1]} : vector<8x2xf32> to vector<1x2xf32>
    %161 = vector.broadcast %160 : vector<1x2xf32> to vector<8x2xf32>
    %162 = arith.mulf %58, %161 : vector<8x2xf32>
    %163 = arith.addf %159, %162 : vector<8x2xf32>
    %c3_25 = arith.constant 3 : index
    %c0_26 = arith.constant 0 : index
    %c0_27 = arith.constant 0 : index
    %164 = vector.load %arg2[%c3_25, %c0_26, %c0_27] : memref<4x8x2xf32, #tpu.memory_space<vmem>>, vector<1x8x2xf32>
    %165 = vector.shape_cast %164 : vector<1x8x2xf32> to vector<8x2xf32>
    %166 = arith.mulf %26, %165 : vector<8x2xf32>
    %167 = vector.extract_strided_slice %165 {offsets = [0, 0], sizes = [1, 2], strides = [1, 1]} : vector<8x2xf32> to vector<1x2xf32>
    %168 = vector.broadcast %167 : vector<1x2xf32> to vector<8x2xf32>
    %169 = arith.mulf %30, %168 : vector<8x2xf32>
    %170 = arith.addf %166, %169 : vector<8x2xf32>
    %171 = vector.extract_strided_slice %165 {offsets = [1, 0], sizes = [1, 2], strides = [1, 1]} : vector<8x2xf32> to vector<1x2xf32>
    %172 = vector.broadcast %171 : vector<1x2xf32> to vector<8x2xf32>
    %173 = arith.mulf %34, %172 : vector<8x2xf32>
    %174 = arith.addf %170, %173 : vector<8x2xf32>
    %175 = vector.extract_strided_slice %165 {offsets = [2, 0], sizes = [1, 2], strides = [1, 1]} : vector<8x2xf32> to vector<1x2xf32>
    %176 = vector.broadcast %175 : vector<1x2xf32> to vector<8x2xf32>
    %177 = arith.mulf %38, %176 : vector<8x2xf32>
    %178 = arith.addf %174, %177 : vector<8x2xf32>
    %179 = vector.extract_strided_slice %165 {offsets = [3, 0], sizes = [1, 2], strides = [1, 1]} : vector<8x2xf32> to vector<1x2xf32>
    %180 = vector.broadcast %179 : vector<1x2xf32> to vector<8x2xf32>
    %181 = arith.mulf %42, %180 : vector<8x2xf32>
    %182 = arith.addf %178, %181 : vector<8x2xf32>
    %183 = vector.extract_strided_slice %165 {offsets = [4, 0], sizes = [1, 2], strides = [1, 1]} : vector<8x2xf32> to vector<1x2xf32>
    %184 = vector.broadcast %183 : vector<1x2xf32> to vector<8x2xf32>
    %185 = arith.mulf %46, %184 : vector<8x2xf32>
    %186 = arith.addf %182, %185 : vector<8x2xf32>
    %187 = vector.extract_strided_slice %165 {offsets = [5, 0], sizes = [1, 2], strides = [1, 1]} : vector<8x2xf32> to vector<1x2xf32>
    %188 = vector.broadcast %187 : vector<1x2xf32> to vector<8x2xf32>
    %189 = arith.mulf %50, %188 : vector<8x2xf32>
    %190 = arith.addf %186, %189 : vector<8x2xf32>
    %191 = vector.extract_strided_slice %165 {offsets = [6, 0], sizes = [1, 2], strides = [1, 1]} : vector<8x2xf32> to vector<1x2xf32>
    %192 = vector.broadcast %191 : vector<1x2xf32> to vector<8x2xf32>
    %193 = arith.mulf %54, %192 : vector<8x2xf32>
    %194 = arith.addf %190, %193 : vector<8x2xf32>
    %195 = vector.extract_strided_slice %165 {offsets = [7, 0], sizes = [1, 2], strides = [1, 1]} : vector<8x2xf32> to vector<1x2xf32>
    %196 = vector.broadcast %195 : vector<1x2xf32> to vector<8x2xf32>
    %197 = arith.mulf %58, %196 : vector<8x2xf32>
    %198 = arith.addf %194, %197 : vector<8x2xf32>
    %c0_28 = arith.constant 0 : index
    %c0_29 = arith.constant 0 : index
    %199 = memref.load %arg3[%c0_28, %c0_29] : memref<4x8xf32, #tpu.memory_space<smem>>
    %200 = vector.broadcast %199 : f32 to vector<8x2xf32>
    %201 = arith.mulf %93, %200 : vector<8x2xf32>
    %c1_30 = arith.constant 1 : index
    %c0_31 = arith.constant 0 : index
    %202 = memref.load %arg3[%c1_30, %c0_31] : memref<4x8xf32, #tpu.memory_space<smem>>
    %203 = vector.broadcast %202 : f32 to vector<8x2xf32>
    %204 = arith.mulf %128, %203 : vector<8x2xf32>
    %205 = arith.addf %201, %204 : vector<8x2xf32>
    %c2_32 = arith.constant 2 : index
    %c0_33 = arith.constant 0 : index
    %206 = memref.load %arg3[%c2_32, %c0_33] : memref<4x8xf32, #tpu.memory_space<smem>>
    %207 = vector.broadcast %206 : f32 to vector<8x2xf32>
    %208 = arith.mulf %163, %207 : vector<8x2xf32>
    %209 = arith.addf %205, %208 : vector<8x2xf32>
    %c3_34 = arith.constant 3 : index
    %c0_35 = arith.constant 0 : index
    %210 = memref.load %arg3[%c3_34, %c0_35] : memref<4x8xf32, #tpu.memory_space<smem>>
    %211 = vector.broadcast %210 : f32 to vector<8x2xf32>
    %212 = arith.mulf %198, %211 : vector<8x2xf32>
    %213 = arith.addf %209, %212 : vector<8x2xf32>
    %c0_36 = arith.constant 0 : index
    %c0_37 = arith.constant 0 : index
    %214 = memref.load %arg4[%c0_36, %c0_37] : memref<1x8xf32, #tpu.memory_space<smem>>
    %215 = vector.broadcast %214 : f32 to vector<8x2xf32>
    %216 = arith.addf %213, %215 : vector<8x2xf32>
    %cst_38 = arith.constant 0.000000e+00 : f32
    %217 = vector.broadcast %cst_38 : f32 to vector<8x2xf32>
    %218 = arith.maximumf %216, %217 : vector<8x2xf32>
    %c0_39 = arith.constant 0 : index
    %c1_40 = arith.constant 1 : index
    %219 = memref.load %arg3[%c0_39, %c1_40] : memref<4x8xf32, #tpu.memory_space<smem>>
    %220 = vector.broadcast %219 : f32 to vector<8x2xf32>
    %221 = arith.mulf %93, %220 : vector<8x2xf32>
    %c1_41 = arith.constant 1 : index
    %c1_42 = arith.constant 1 : index
    %222 = memref.load %arg3[%c1_41, %c1_42] : memref<4x8xf32, #tpu.memory_space<smem>>
    %223 = vector.broadcast %222 : f32 to vector<8x2xf32>
    %224 = arith.mulf %128, %223 : vector<8x2xf32>
    %225 = arith.addf %221, %224 : vector<8x2xf32>
    %c2_43 = arith.constant 2 : index
    %c1_44 = arith.constant 1 : index
    %226 = memref.load %arg3[%c2_43, %c1_44] : memref<4x8xf32, #tpu.memory_space<smem>>
    %227 = vector.broadcast %226 : f32 to vector<8x2xf32>
    %228 = arith.mulf %163, %227 : vector<8x2xf32>
    %229 = arith.addf %225, %228 : vector<8x2xf32>
    %c3_45 = arith.constant 3 : index
    %c1_46 = arith.constant 1 : index
    %230 = memref.load %arg3[%c3_45, %c1_46] : memref<4x8xf32, #tpu.memory_space<smem>>
    %231 = vector.broadcast %230 : f32 to vector<8x2xf32>
    %232 = arith.mulf %198, %231 : vector<8x2xf32>
    %233 = arith.addf %229, %232 : vector<8x2xf32>
    %c0_47 = arith.constant 0 : index
    %c1_48 = arith.constant 1 : index
    %234 = memref.load %arg4[%c0_47, %c1_48] : memref<1x8xf32, #tpu.memory_space<smem>>
    %235 = vector.broadcast %234 : f32 to vector<8x2xf32>
    %236 = arith.addf %233, %235 : vector<8x2xf32>
    %cst_49 = arith.constant 0.000000e+00 : f32
    %237 = vector.broadcast %cst_49 : f32 to vector<8x2xf32>
    %238 = arith.maximumf %236, %237 : vector<8x2xf32>
    %c0_50 = arith.constant 0 : index
    %c2_51 = arith.constant 2 : index
    %239 = memref.load %arg3[%c0_50, %c2_51] : memref<4x8xf32, #tpu.memory_space<smem>>
    %240 = vector.broadcast %239 : f32 to vector<8x2xf32>
    %241 = arith.mulf %93, %240 : vector<8x2xf32>
    %c1_52 = arith.constant 1 : index
    %c2_53 = arith.constant 2 : index
    %242 = memref.load %arg3[%c1_52, %c2_53] : memref<4x8xf32, #tpu.memory_space<smem>>
    %243 = vector.broadcast %242 : f32 to vector<8x2xf32>
    %244 = arith.mulf %128, %243 : vector<8x2xf32>
    %245 = arith.addf %241, %244 : vector<8x2xf32>
    %c2_54 = arith.constant 2 : index
    %c2_55 = arith.constant 2 : index
    %246 = memref.load %arg3[%c2_54, %c2_55] : memref<4x8xf32, #tpu.memory_space<smem>>
    %247 = vector.broadcast %246 : f32 to vector<8x2xf32>
    %248 = arith.mulf %163, %247 : vector<8x2xf32>
    %249 = arith.addf %245, %248 : vector<8x2xf32>
    %c3_56 = arith.constant 3 : index
    %c2_57 = arith.constant 2 : index
    %250 = memref.load %arg3[%c3_56, %c2_57] : memref<4x8xf32, #tpu.memory_space<smem>>
    %251 = vector.broadcast %250 : f32 to vector<8x2xf32>
    %252 = arith.mulf %198, %251 : vector<8x2xf32>
    %253 = arith.addf %249, %252 : vector<8x2xf32>
    %c0_58 = arith.constant 0 : index
    %c2_59 = arith.constant 2 : index
    %254 = memref.load %arg4[%c0_58, %c2_59] : memref<1x8xf32, #tpu.memory_space<smem>>
    %255 = vector.broadcast %254 : f32 to vector<8x2xf32>
    %256 = arith.addf %253, %255 : vector<8x2xf32>
    %cst_60 = arith.constant 0.000000e+00 : f32
    %257 = vector.broadcast %cst_60 : f32 to vector<8x2xf32>
    %258 = arith.maximumf %256, %257 : vector<8x2xf32>
    %c0_61 = arith.constant 0 : index
    %c3_62 = arith.constant 3 : index
    %259 = memref.load %arg3[%c0_61, %c3_62] : memref<4x8xf32, #tpu.memory_space<smem>>
    %260 = vector.broadcast %259 : f32 to vector<8x2xf32>
    %261 = arith.mulf %93, %260 : vector<8x2xf32>
    %c1_63 = arith.constant 1 : index
    %c3_64 = arith.constant 3 : index
    %262 = memref.load %arg3[%c1_63, %c3_64] : memref<4x8xf32, #tpu.memory_space<smem>>
    %263 = vector.broadcast %262 : f32 to vector<8x2xf32>
    %264 = arith.mulf %128, %263 : vector<8x2xf32>
    %265 = arith.addf %261, %264 : vector<8x2xf32>
    %c2_65 = arith.constant 2 : index
    %c3_66 = arith.constant 3 : index
    %266 = memref.load %arg3[%c2_65, %c3_66] : memref<4x8xf32, #tpu.memory_space<smem>>
    %267 = vector.broadcast %266 : f32 to vector<8x2xf32>
    %268 = arith.mulf %163, %267 : vector<8x2xf32>
    %269 = arith.addf %265, %268 : vector<8x2xf32>
    %c3_67 = arith.constant 3 : index
    %c3_68 = arith.constant 3 : index
    %270 = memref.load %arg3[%c3_67, %c3_68] : memref<4x8xf32, #tpu.memory_space<smem>>
    %271 = vector.broadcast %270 : f32 to vector<8x2xf32>
    %272 = arith.mulf %198, %271 : vector<8x2xf32>
    %273 = arith.addf %269, %272 : vector<8x2xf32>
    %c0_69 = arith.constant 0 : index
    %c3_70 = arith.constant 3 : index
    %274 = memref.load %arg4[%c0_69, %c3_70] : memref<1x8xf32, #tpu.memory_space<smem>>
    %275 = vector.broadcast %274 : f32 to vector<8x2xf32>
    %276 = arith.addf %273, %275 : vector<8x2xf32>
    %cst_71 = arith.constant 0.000000e+00 : f32
    %277 = vector.broadcast %cst_71 : f32 to vector<8x2xf32>
    %278 = arith.maximumf %276, %277 : vector<8x2xf32>
    %c0_72 = arith.constant 0 : index
    %c4_73 = arith.constant 4 : index
    %279 = memref.load %arg3[%c0_72, %c4_73] : memref<4x8xf32, #tpu.memory_space<smem>>
    %280 = vector.broadcast %279 : f32 to vector<8x2xf32>
    %281 = arith.mulf %93, %280 : vector<8x2xf32>
    %c1_74 = arith.constant 1 : index
    %c4_75 = arith.constant 4 : index
    %282 = memref.load %arg3[%c1_74, %c4_75] : memref<4x8xf32, #tpu.memory_space<smem>>
    %283 = vector.broadcast %282 : f32 to vector<8x2xf32>
    %284 = arith.mulf %128, %283 : vector<8x2xf32>
    %285 = arith.addf %281, %284 : vector<8x2xf32>
    %c2_76 = arith.constant 2 : index
    %c4_77 = arith.constant 4 : index
    %286 = memref.load %arg3[%c2_76, %c4_77] : memref<4x8xf32, #tpu.memory_space<smem>>
    %287 = vector.broadcast %286 : f32 to vector<8x2xf32>
    %288 = arith.mulf %163, %287 : vector<8x2xf32>
    %289 = arith.addf %285, %288 : vector<8x2xf32>
    %c3_78 = arith.constant 3 : index
    %c4_79 = arith.constant 4 : index
    %290 = memref.load %arg3[%c3_78, %c4_79] : memref<4x8xf32, #tpu.memory_space<smem>>
    %291 = vector.broadcast %290 : f32 to vector<8x2xf32>
    %292 = arith.mulf %198, %291 : vector<8x2xf32>
    %293 = arith.addf %289, %292 : vector<8x2xf32>
    %c0_80 = arith.constant 0 : index
    %c4_81 = arith.constant 4 : index
    %294 = memref.load %arg4[%c0_80, %c4_81] : memref<1x8xf32, #tpu.memory_space<smem>>
    %295 = vector.broadcast %294 : f32 to vector<8x2xf32>
    %296 = arith.addf %293, %295 : vector<8x2xf32>
    %cst_82 = arith.constant 0.000000e+00 : f32
    %297 = vector.broadcast %cst_82 : f32 to vector<8x2xf32>
    %298 = arith.maximumf %296, %297 : vector<8x2xf32>
    %c0_83 = arith.constant 0 : index
    %c5_84 = arith.constant 5 : index
    %299 = memref.load %arg3[%c0_83, %c5_84] : memref<4x8xf32, #tpu.memory_space<smem>>
    %300 = vector.broadcast %299 : f32 to vector<8x2xf32>
    %301 = arith.mulf %93, %300 : vector<8x2xf32>
    %c1_85 = arith.constant 1 : index
    %c5_86 = arith.constant 5 : index
    %302 = memref.load %arg3[%c1_85, %c5_86] : memref<4x8xf32, #tpu.memory_space<smem>>
    %303 = vector.broadcast %302 : f32 to vector<8x2xf32>
    %304 = arith.mulf %128, %303 : vector<8x2xf32>
    %305 = arith.addf %301, %304 : vector<8x2xf32>
    %c2_87 = arith.constant 2 : index
    %c5_88 = arith.constant 5 : index
    %306 = memref.load %arg3[%c2_87, %c5_88] : memref<4x8xf32, #tpu.memory_space<smem>>
    %307 = vector.broadcast %306 : f32 to vector<8x2xf32>
    %308 = arith.mulf %163, %307 : vector<8x2xf32>
    %309 = arith.addf %305, %308 : vector<8x2xf32>
    %c3_89 = arith.constant 3 : index
    %c5_90 = arith.constant 5 : index
    %310 = memref.load %arg3[%c3_89, %c5_90] : memref<4x8xf32, #tpu.memory_space<smem>>
    %311 = vector.broadcast %310 : f32 to vector<8x2xf32>
    %312 = arith.mulf %198, %311 : vector<8x2xf32>
    %313 = arith.addf %309, %312 : vector<8x2xf32>
    %c0_91 = arith.constant 0 : index
    %c5_92 = arith.constant 5 : index
    %314 = memref.load %arg4[%c0_91, %c5_92] : memref<1x8xf32, #tpu.memory_space<smem>>
    %315 = vector.broadcast %314 : f32 to vector<8x2xf32>
    %316 = arith.addf %313, %315 : vector<8x2xf32>
    %cst_93 = arith.constant 0.000000e+00 : f32
    %317 = vector.broadcast %cst_93 : f32 to vector<8x2xf32>
    %318 = arith.maximumf %316, %317 : vector<8x2xf32>
    %c0_94 = arith.constant 0 : index
    %c6_95 = arith.constant 6 : index
    %319 = memref.load %arg3[%c0_94, %c6_95] : memref<4x8xf32, #tpu.memory_space<smem>>
    %320 = vector.broadcast %319 : f32 to vector<8x2xf32>
    %321 = arith.mulf %93, %320 : vector<8x2xf32>
    %c1_96 = arith.constant 1 : index
    %c6_97 = arith.constant 6 : index
    %322 = memref.load %arg3[%c1_96, %c6_97] : memref<4x8xf32, #tpu.memory_space<smem>>
    %323 = vector.broadcast %322 : f32 to vector<8x2xf32>
    %324 = arith.mulf %128, %323 : vector<8x2xf32>
    %325 = arith.addf %321, %324 : vector<8x2xf32>
    %c2_98 = arith.constant 2 : index
    %c6_99 = arith.constant 6 : index
    %326 = memref.load %arg3[%c2_98, %c6_99] : memref<4x8xf32, #tpu.memory_space<smem>>
    %327 = vector.broadcast %326 : f32 to vector<8x2xf32>
    %328 = arith.mulf %163, %327 : vector<8x2xf32>
    %329 = arith.addf %325, %328 : vector<8x2xf32>
    %c3_100 = arith.constant 3 : index
    %c6_101 = arith.constant 6 : index
    %330 = memref.load %arg3[%c3_100, %c6_101] : memref<4x8xf32, #tpu.memory_space<smem>>
    %331 = vector.broadcast %330 : f32 to vector<8x2xf32>
    %332 = arith.mulf %198, %331 : vector<8x2xf32>
    %333 = arith.addf %329, %332 : vector<8x2xf32>
    %c0_102 = arith.constant 0 : index
    %c6_103 = arith.constant 6 : index
    %334 = memref.load %arg4[%c0_102, %c6_103] : memref<1x8xf32, #tpu.memory_space<smem>>
    %335 = vector.broadcast %334 : f32 to vector<8x2xf32>
    %336 = arith.addf %333, %335 : vector<8x2xf32>
    %cst_104 = arith.constant 0.000000e+00 : f32
    %337 = vector.broadcast %cst_104 : f32 to vector<8x2xf32>
    %338 = arith.maximumf %336, %337 : vector<8x2xf32>
    %c0_105 = arith.constant 0 : index
    %c7_106 = arith.constant 7 : index
    %339 = memref.load %arg3[%c0_105, %c7_106] : memref<4x8xf32, #tpu.memory_space<smem>>
    %340 = vector.broadcast %339 : f32 to vector<8x2xf32>
    %341 = arith.mulf %93, %340 : vector<8x2xf32>
    %c1_107 = arith.constant 1 : index
    %c7_108 = arith.constant 7 : index
    %342 = memref.load %arg3[%c1_107, %c7_108] : memref<4x8xf32, #tpu.memory_space<smem>>
    %343 = vector.broadcast %342 : f32 to vector<8x2xf32>
    %344 = arith.mulf %128, %343 : vector<8x2xf32>
    %345 = arith.addf %341, %344 : vector<8x2xf32>
    %c2_109 = arith.constant 2 : index
    %c7_110 = arith.constant 7 : index
    %346 = memref.load %arg3[%c2_109, %c7_110] : memref<4x8xf32, #tpu.memory_space<smem>>
    %347 = vector.broadcast %346 : f32 to vector<8x2xf32>
    %348 = arith.mulf %163, %347 : vector<8x2xf32>
    %349 = arith.addf %345, %348 : vector<8x2xf32>
    %c3_111 = arith.constant 3 : index
    %c7_112 = arith.constant 7 : index
    %350 = memref.load %arg3[%c3_111, %c7_112] : memref<4x8xf32, #tpu.memory_space<smem>>
    %351 = vector.broadcast %350 : f32 to vector<8x2xf32>
    %352 = arith.mulf %198, %351 : vector<8x2xf32>
    %353 = arith.addf %349, %352 : vector<8x2xf32>
    %c0_113 = arith.constant 0 : index
    %c7_114 = arith.constant 7 : index
    %354 = memref.load %arg4[%c0_113, %c7_114] : memref<1x8xf32, #tpu.memory_space<smem>>
    %355 = vector.broadcast %354 : f32 to vector<8x2xf32>
    %356 = arith.addf %353, %355 : vector<8x2xf32>
    %cst_115 = arith.constant 0.000000e+00 : f32
    %357 = vector.broadcast %cst_115 : f32 to vector<8x2xf32>
    %358 = arith.maximumf %356, %357 : vector<8x2xf32>
    %c0_116 = arith.constant 0 : index
    %c0_117 = arith.constant 0 : index
    %359 = memref.load %arg7[%c0_116, %c0_117] : memref<1x1xf32, #tpu.memory_space<smem>>
    %c0_118 = arith.constant 0 : index
    %c0_119 = arith.constant 0 : index
    %360 = memref.load %arg5[%c0_118, %c0_119] : memref<1x8xf32, #tpu.memory_space<smem>>
    %361 = vector.broadcast %360 : f32 to vector<8x2xf32>
    %362 = arith.mulf %218, %361 : vector<8x2xf32>
    %c0_120 = arith.constant 0 : index
    %c1_121 = arith.constant 1 : index
    %363 = memref.load %arg5[%c0_120, %c1_121] : memref<1x8xf32, #tpu.memory_space<smem>>
    %364 = vector.broadcast %363 : f32 to vector<8x2xf32>
    %365 = arith.mulf %238, %364 : vector<8x2xf32>
    %366 = arith.addf %362, %365 : vector<8x2xf32>
    %c0_122 = arith.constant 0 : index
    %c2_123 = arith.constant 2 : index
    %367 = memref.load %arg5[%c0_122, %c2_123] : memref<1x8xf32, #tpu.memory_space<smem>>
    %368 = vector.broadcast %367 : f32 to vector<8x2xf32>
    %369 = arith.mulf %258, %368 : vector<8x2xf32>
    %370 = arith.addf %366, %369 : vector<8x2xf32>
    %c0_124 = arith.constant 0 : index
    %c3_125 = arith.constant 3 : index
    %371 = memref.load %arg5[%c0_124, %c3_125] : memref<1x8xf32, #tpu.memory_space<smem>>
    %372 = vector.broadcast %371 : f32 to vector<8x2xf32>
    %373 = arith.mulf %278, %372 : vector<8x2xf32>
    %374 = arith.addf %370, %373 : vector<8x2xf32>
    %c0_126 = arith.constant 0 : index
    %c4_127 = arith.constant 4 : index
    %375 = memref.load %arg5[%c0_126, %c4_127] : memref<1x8xf32, #tpu.memory_space<smem>>
    %376 = vector.broadcast %375 : f32 to vector<8x2xf32>
    %377 = arith.mulf %298, %376 : vector<8x2xf32>
    %378 = arith.addf %374, %377 : vector<8x2xf32>
    %c0_128 = arith.constant 0 : index
    %c5_129 = arith.constant 5 : index
    %379 = memref.load %arg5[%c0_128, %c5_129] : memref<1x8xf32, #tpu.memory_space<smem>>
    %380 = vector.broadcast %379 : f32 to vector<8x2xf32>
    %381 = arith.mulf %318, %380 : vector<8x2xf32>
    %382 = arith.addf %378, %381 : vector<8x2xf32>
    %c0_130 = arith.constant 0 : index
    %c6_131 = arith.constant 6 : index
    %383 = memref.load %arg5[%c0_130, %c6_131] : memref<1x8xf32, #tpu.memory_space<smem>>
    %384 = vector.broadcast %383 : f32 to vector<8x2xf32>
    %385 = arith.mulf %338, %384 : vector<8x2xf32>
    %386 = arith.addf %382, %385 : vector<8x2xf32>
    %c0_132 = arith.constant 0 : index
    %c7_133 = arith.constant 7 : index
    %387 = memref.load %arg5[%c0_132, %c7_133] : memref<1x8xf32, #tpu.memory_space<smem>>
    %388 = vector.broadcast %387 : f32 to vector<8x2xf32>
    %389 = arith.mulf %358, %388 : vector<8x2xf32>
    %390 = arith.addf %386, %389 : vector<8x2xf32>
    %391 = vector.broadcast %359 : f32 to vector<8x2xf32>
    %392 = arith.addf %390, %391 : vector<8x2xf32>
    %393 = arith.mulf %26, %218 : vector<8x2xf32>
    %394 = vector.extract_strided_slice %218 {offsets = [0, 0], sizes = [1, 2], strides = [1, 1]} : vector<8x2xf32> to vector<1x2xf32>
    %395 = vector.broadcast %394 : vector<1x2xf32> to vector<8x2xf32>
    %396 = arith.mulf %30, %395 : vector<8x2xf32>
    %397 = arith.addf %393, %396 : vector<8x2xf32>
    %398 = vector.extract_strided_slice %218 {offsets = [1, 0], sizes = [1, 2], strides = [1, 1]} : vector<8x2xf32> to vector<1x2xf32>
    %399 = vector.broadcast %398 : vector<1x2xf32> to vector<8x2xf32>
    %400 = arith.mulf %34, %399 : vector<8x2xf32>
    %401 = arith.addf %397, %400 : vector<8x2xf32>
    %402 = vector.extract_strided_slice %218 {offsets = [2, 0], sizes = [1, 2], strides = [1, 1]} : vector<8x2xf32> to vector<1x2xf32>
    %403 = vector.broadcast %402 : vector<1x2xf32> to vector<8x2xf32>
    %404 = arith.mulf %38, %403 : vector<8x2xf32>
    %405 = arith.addf %401, %404 : vector<8x2xf32>
    %406 = vector.extract_strided_slice %218 {offsets = [3, 0], sizes = [1, 2], strides = [1, 1]} : vector<8x2xf32> to vector<1x2xf32>
    %407 = vector.broadcast %406 : vector<1x2xf32> to vector<8x2xf32>
    %408 = arith.mulf %42, %407 : vector<8x2xf32>
    %409 = arith.addf %405, %408 : vector<8x2xf32>
    %410 = vector.extract_strided_slice %218 {offsets = [4, 0], sizes = [1, 2], strides = [1, 1]} : vector<8x2xf32> to vector<1x2xf32>
    %411 = vector.broadcast %410 : vector<1x2xf32> to vector<8x2xf32>
    %412 = arith.mulf %46, %411 : vector<8x2xf32>
    %413 = arith.addf %409, %412 : vector<8x2xf32>
    %414 = vector.extract_strided_slice %218 {offsets = [5, 0], sizes = [1, 2], strides = [1, 1]} : vector<8x2xf32> to vector<1x2xf32>
    %415 = vector.broadcast %414 : vector<1x2xf32> to vector<8x2xf32>
    %416 = arith.mulf %50, %415 : vector<8x2xf32>
    %417 = arith.addf %413, %416 : vector<8x2xf32>
    %418 = vector.extract_strided_slice %218 {offsets = [6, 0], sizes = [1, 2], strides = [1, 1]} : vector<8x2xf32> to vector<1x2xf32>
    %419 = vector.broadcast %418 : vector<1x2xf32> to vector<8x2xf32>
    %420 = arith.mulf %54, %419 : vector<8x2xf32>
    %421 = arith.addf %417, %420 : vector<8x2xf32>
    %422 = vector.extract_strided_slice %218 {offsets = [7, 0], sizes = [1, 2], strides = [1, 1]} : vector<8x2xf32> to vector<1x2xf32>
    %423 = vector.broadcast %422 : vector<1x2xf32> to vector<8x2xf32>
    %424 = arith.mulf %58, %423 : vector<8x2xf32>
    %425 = arith.addf %421, %424 : vector<8x2xf32>
    %c0_134 = arith.constant 0 : index
    %c0_135 = arith.constant 0 : index
    %426 = memref.load %arg5[%c0_134, %c0_135] : memref<1x8xf32, #tpu.memory_space<smem>>
    %427 = vector.broadcast %426 : f32 to vector<8x2xf32>
    %428 = arith.mulf %425, %427 : vector<8x2xf32>
    %429 = arith.mulf %26, %238 : vector<8x2xf32>
    %430 = vector.extract_strided_slice %238 {offsets = [0, 0], sizes = [1, 2], strides = [1, 1]} : vector<8x2xf32> to vector<1x2xf32>
    %431 = vector.broadcast %430 : vector<1x2xf32> to vector<8x2xf32>
    %432 = arith.mulf %30, %431 : vector<8x2xf32>
    %433 = arith.addf %429, %432 : vector<8x2xf32>
    %434 = vector.extract_strided_slice %238 {offsets = [1, 0], sizes = [1, 2], strides = [1, 1]} : vector<8x2xf32> to vector<1x2xf32>
    %435 = vector.broadcast %434 : vector<1x2xf32> to vector<8x2xf32>
    %436 = arith.mulf %34, %435 : vector<8x2xf32>
    %437 = arith.addf %433, %436 : vector<8x2xf32>
    %438 = vector.extract_strided_slice %238 {offsets = [2, 0], sizes = [1, 2], strides = [1, 1]} : vector<8x2xf32> to vector<1x2xf32>
    %439 = vector.broadcast %438 : vector<1x2xf32> to vector<8x2xf32>
    %440 = arith.mulf %38, %439 : vector<8x2xf32>
    %441 = arith.addf %437, %440 : vector<8x2xf32>
    %442 = vector.extract_strided_slice %238 {offsets = [3, 0], sizes = [1, 2], strides = [1, 1]} : vector<8x2xf32> to vector<1x2xf32>
    %443 = vector.broadcast %442 : vector<1x2xf32> to vector<8x2xf32>
    %444 = arith.mulf %42, %443 : vector<8x2xf32>
    %445 = arith.addf %441, %444 : vector<8x2xf32>
    %446 = vector.extract_strided_slice %238 {offsets = [4, 0], sizes = [1, 2], strides = [1, 1]} : vector<8x2xf32> to vector<1x2xf32>
    %447 = vector.broadcast %446 : vector<1x2xf32> to vector<8x2xf32>
    %448 = arith.mulf %46, %447 : vector<8x2xf32>
    %449 = arith.addf %445, %448 : vector<8x2xf32>
    %450 = vector.extract_strided_slice %238 {offsets = [5, 0], sizes = [1, 2], strides = [1, 1]} : vector<8x2xf32> to vector<1x2xf32>
    %451 = vector.broadcast %450 : vector<1x2xf32> to vector<8x2xf32>
    %452 = arith.mulf %50, %451 : vector<8x2xf32>
    %453 = arith.addf %449, %452 : vector<8x2xf32>
    %454 = vector.extract_strided_slice %238 {offsets = [6, 0], sizes = [1, 2], strides = [1, 1]} : vector<8x2xf32> to vector<1x2xf32>
    %455 = vector.broadcast %454 : vector<1x2xf32> to vector<8x2xf32>
    %456 = arith.mulf %54, %455 : vector<8x2xf32>
    %457 = arith.addf %453, %456 : vector<8x2xf32>
    %458 = vector.extract_strided_slice %238 {offsets = [7, 0], sizes = [1, 2], strides = [1, 1]} : vector<8x2xf32> to vector<1x2xf32>
    %459 = vector.broadcast %458 : vector<1x2xf32> to vector<8x2xf32>
    %460 = arith.mulf %58, %459 : vector<8x2xf32>
    %461 = arith.addf %457, %460 : vector<8x2xf32>
    %c0_136 = arith.constant 0 : index
    %c1_137 = arith.constant 1 : index
    %462 = memref.load %arg5[%c0_136, %c1_137] : memref<1x8xf32, #tpu.memory_space<smem>>
    %463 = vector.broadcast %462 : f32 to vector<8x2xf32>
    %464 = arith.mulf %461, %463 : vector<8x2xf32>
    %465 = arith.addf %428, %464 : vector<8x2xf32>
    %466 = arith.mulf %26, %258 : vector<8x2xf32>
    %467 = vector.extract_strided_slice %258 {offsets = [0, 0], sizes = [1, 2], strides = [1, 1]} : vector<8x2xf32> to vector<1x2xf32>
    %468 = vector.broadcast %467 : vector<1x2xf32> to vector<8x2xf32>
    %469 = arith.mulf %30, %468 : vector<8x2xf32>
    %470 = arith.addf %466, %469 : vector<8x2xf32>
    %471 = vector.extract_strided_slice %258 {offsets = [1, 0], sizes = [1, 2], strides = [1, 1]} : vector<8x2xf32> to vector<1x2xf32>
    %472 = vector.broadcast %471 : vector<1x2xf32> to vector<8x2xf32>
    %473 = arith.mulf %34, %472 : vector<8x2xf32>
    %474 = arith.addf %470, %473 : vector<8x2xf32>
    %475 = vector.extract_strided_slice %258 {offsets = [2, 0], sizes = [1, 2], strides = [1, 1]} : vector<8x2xf32> to vector<1x2xf32>
    %476 = vector.broadcast %475 : vector<1x2xf32> to vector<8x2xf32>
    %477 = arith.mulf %38, %476 : vector<8x2xf32>
    %478 = arith.addf %474, %477 : vector<8x2xf32>
    %479 = vector.extract_strided_slice %258 {offsets = [3, 0], sizes = [1, 2], strides = [1, 1]} : vector<8x2xf32> to vector<1x2xf32>
    %480 = vector.broadcast %479 : vector<1x2xf32> to vector<8x2xf32>
    %481 = arith.mulf %42, %480 : vector<8x2xf32>
    %482 = arith.addf %478, %481 : vector<8x2xf32>
    %483 = vector.extract_strided_slice %258 {offsets = [4, 0], sizes = [1, 2], strides = [1, 1]} : vector<8x2xf32> to vector<1x2xf32>
    %484 = vector.broadcast %483 : vector<1x2xf32> to vector<8x2xf32>
    %485 = arith.mulf %46, %484 : vector<8x2xf32>
    %486 = arith.addf %482, %485 : vector<8x2xf32>
    %487 = vector.extract_strided_slice %258 {offsets = [5, 0], sizes = [1, 2], strides = [1, 1]} : vector<8x2xf32> to vector<1x2xf32>
    %488 = vector.broadcast %487 : vector<1x2xf32> to vector<8x2xf32>
    %489 = arith.mulf %50, %488 : vector<8x2xf32>
    %490 = arith.addf %486, %489 : vector<8x2xf32>
    %491 = vector.extract_strided_slice %258 {offsets = [6, 0], sizes = [1, 2], strides = [1, 1]} : vector<8x2xf32> to vector<1x2xf32>
    %492 = vector.broadcast %491 : vector<1x2xf32> to vector<8x2xf32>
    %493 = arith.mulf %54, %492 : vector<8x2xf32>
    %494 = arith.addf %490, %493 : vector<8x2xf32>
    %495 = vector.extract_strided_slice %258 {offsets = [7, 0], sizes = [1, 2], strides = [1, 1]} : vector<8x2xf32> to vector<1x2xf32>
    %496 = vector.broadcast %495 : vector<1x2xf32> to vector<8x2xf32>
    %497 = arith.mulf %58, %496 : vector<8x2xf32>
    %498 = arith.addf %494, %497 : vector<8x2xf32>
    %c0_138 = arith.constant 0 : index
    %c2_139 = arith.constant 2 : index
    %499 = memref.load %arg5[%c0_138, %c2_139] : memref<1x8xf32, #tpu.memory_space<smem>>
    %500 = vector.broadcast %499 : f32 to vector<8x2xf32>
    %501 = arith.mulf %498, %500 : vector<8x2xf32>
    %502 = arith.addf %465, %501 : vector<8x2xf32>
    %503 = arith.mulf %26, %278 : vector<8x2xf32>
    %504 = vector.extract_strided_slice %278 {offsets = [0, 0], sizes = [1, 2], strides = [1, 1]} : vector<8x2xf32> to vector<1x2xf32>
    %505 = vector.broadcast %504 : vector<1x2xf32> to vector<8x2xf32>
    %506 = arith.mulf %30, %505 : vector<8x2xf32>
    %507 = arith.addf %503, %506 : vector<8x2xf32>
    %508 = vector.extract_strided_slice %278 {offsets = [1, 0], sizes = [1, 2], strides = [1, 1]} : vector<8x2xf32> to vector<1x2xf32>
    %509 = vector.broadcast %508 : vector<1x2xf32> to vector<8x2xf32>
    %510 = arith.mulf %34, %509 : vector<8x2xf32>
    %511 = arith.addf %507, %510 : vector<8x2xf32>
    %512 = vector.extract_strided_slice %278 {offsets = [2, 0], sizes = [1, 2], strides = [1, 1]} : vector<8x2xf32> to vector<1x2xf32>
    %513 = vector.broadcast %512 : vector<1x2xf32> to vector<8x2xf32>
    %514 = arith.mulf %38, %513 : vector<8x2xf32>
    %515 = arith.addf %511, %514 : vector<8x2xf32>
    %516 = vector.extract_strided_slice %278 {offsets = [3, 0], sizes = [1, 2], strides = [1, 1]} : vector<8x2xf32> to vector<1x2xf32>
    %517 = vector.broadcast %516 : vector<1x2xf32> to vector<8x2xf32>
    %518 = arith.mulf %42, %517 : vector<8x2xf32>
    %519 = arith.addf %515, %518 : vector<8x2xf32>
    %520 = vector.extract_strided_slice %278 {offsets = [4, 0], sizes = [1, 2], strides = [1, 1]} : vector<8x2xf32> to vector<1x2xf32>
    %521 = vector.broadcast %520 : vector<1x2xf32> to vector<8x2xf32>
    %522 = arith.mulf %46, %521 : vector<8x2xf32>
    %523 = arith.addf %519, %522 : vector<8x2xf32>
    %524 = vector.extract_strided_slice %278 {offsets = [5, 0], sizes = [1, 2], strides = [1, 1]} : vector<8x2xf32> to vector<1x2xf32>
    %525 = vector.broadcast %524 : vector<1x2xf32> to vector<8x2xf32>
    %526 = arith.mulf %50, %525 : vector<8x2xf32>
    %527 = arith.addf %523, %526 : vector<8x2xf32>
    %528 = vector.extract_strided_slice %278 {offsets = [6, 0], sizes = [1, 2], strides = [1, 1]} : vector<8x2xf32> to vector<1x2xf32>
    %529 = vector.broadcast %528 : vector<1x2xf32> to vector<8x2xf32>
    %530 = arith.mulf %54, %529 : vector<8x2xf32>
    %531 = arith.addf %527, %530 : vector<8x2xf32>
    %532 = vector.extract_strided_slice %278 {offsets = [7, 0], sizes = [1, 2], strides = [1, 1]} : vector<8x2xf32> to vector<1x2xf32>
    %533 = vector.broadcast %532 : vector<1x2xf32> to vector<8x2xf32>
    %534 = arith.mulf %58, %533 : vector<8x2xf32>
    %535 = arith.addf %531, %534 : vector<8x2xf32>
    %c0_140 = arith.constant 0 : index
    %c3_141 = arith.constant 3 : index
    %536 = memref.load %arg5[%c0_140, %c3_141] : memref<1x8xf32, #tpu.memory_space<smem>>
    %537 = vector.broadcast %536 : f32 to vector<8x2xf32>
    %538 = arith.mulf %535, %537 : vector<8x2xf32>
    %539 = arith.addf %502, %538 : vector<8x2xf32>
    %540 = arith.mulf %26, %298 : vector<8x2xf32>
    %541 = vector.extract_strided_slice %298 {offsets = [0, 0], sizes = [1, 2], strides = [1, 1]} : vector<8x2xf32> to vector<1x2xf32>
    %542 = vector.broadcast %541 : vector<1x2xf32> to vector<8x2xf32>
    %543 = arith.mulf %30, %542 : vector<8x2xf32>
    %544 = arith.addf %540, %543 : vector<8x2xf32>
    %545 = vector.extract_strided_slice %298 {offsets = [1, 0], sizes = [1, 2], strides = [1, 1]} : vector<8x2xf32> to vector<1x2xf32>
    %546 = vector.broadcast %545 : vector<1x2xf32> to vector<8x2xf32>
    %547 = arith.mulf %34, %546 : vector<8x2xf32>
    %548 = arith.addf %544, %547 : vector<8x2xf32>
    %549 = vector.extract_strided_slice %298 {offsets = [2, 0], sizes = [1, 2], strides = [1, 1]} : vector<8x2xf32> to vector<1x2xf32>
    %550 = vector.broadcast %549 : vector<1x2xf32> to vector<8x2xf32>
    %551 = arith.mulf %38, %550 : vector<8x2xf32>
    %552 = arith.addf %548, %551 : vector<8x2xf32>
    %553 = vector.extract_strided_slice %298 {offsets = [3, 0], sizes = [1, 2], strides = [1, 1]} : vector<8x2xf32> to vector<1x2xf32>
    %554 = vector.broadcast %553 : vector<1x2xf32> to vector<8x2xf32>
    %555 = arith.mulf %42, %554 : vector<8x2xf32>
    %556 = arith.addf %552, %555 : vector<8x2xf32>
    %557 = vector.extract_strided_slice %298 {offsets = [4, 0], sizes = [1, 2], strides = [1, 1]} : vector<8x2xf32> to vector<1x2xf32>
    %558 = vector.broadcast %557 : vector<1x2xf32> to vector<8x2xf32>
    %559 = arith.mulf %46, %558 : vector<8x2xf32>
    %560 = arith.addf %556, %559 : vector<8x2xf32>
    %561 = vector.extract_strided_slice %298 {offsets = [5, 0], sizes = [1, 2], strides = [1, 1]} : vector<8x2xf32> to vector<1x2xf32>
    %562 = vector.broadcast %561 : vector<1x2xf32> to vector<8x2xf32>
    %563 = arith.mulf %50, %562 : vector<8x2xf32>
    %564 = arith.addf %560, %563 : vector<8x2xf32>
    %565 = vector.extract_strided_slice %298 {offsets = [6, 0], sizes = [1, 2], strides = [1, 1]} : vector<8x2xf32> to vector<1x2xf32>
    %566 = vector.broadcast %565 : vector<1x2xf32> to vector<8x2xf32>
    %567 = arith.mulf %54, %566 : vector<8x2xf32>
    %568 = arith.addf %564, %567 : vector<8x2xf32>
    %569 = vector.extract_strided_slice %298 {offsets = [7, 0], sizes = [1, 2], strides = [1, 1]} : vector<8x2xf32> to vector<1x2xf32>
    %570 = vector.broadcast %569 : vector<1x2xf32> to vector<8x2xf32>
    %571 = arith.mulf %58, %570 : vector<8x2xf32>
    %572 = arith.addf %568, %571 : vector<8x2xf32>
    %c0_142 = arith.constant 0 : index
    %c4_143 = arith.constant 4 : index
    %573 = memref.load %arg5[%c0_142, %c4_143] : memref<1x8xf32, #tpu.memory_space<smem>>
    %574 = vector.broadcast %573 : f32 to vector<8x2xf32>
    %575 = arith.mulf %572, %574 : vector<8x2xf32>
    %576 = arith.addf %539, %575 : vector<8x2xf32>
    %577 = arith.mulf %26, %318 : vector<8x2xf32>
    %578 = vector.extract_strided_slice %318 {offsets = [0, 0], sizes = [1, 2], strides = [1, 1]} : vector<8x2xf32> to vector<1x2xf32>
    %579 = vector.broadcast %578 : vector<1x2xf32> to vector<8x2xf32>
    %580 = arith.mulf %30, %579 : vector<8x2xf32>
    %581 = arith.addf %577, %580 : vector<8x2xf32>
    %582 = vector.extract_strided_slice %318 {offsets = [1, 0], sizes = [1, 2], strides = [1, 1]} : vector<8x2xf32> to vector<1x2xf32>
    %583 = vector.broadcast %582 : vector<1x2xf32> to vector<8x2xf32>
    %584 = arith.mulf %34, %583 : vector<8x2xf32>
    %585 = arith.addf %581, %584 : vector<8x2xf32>
    %586 = vector.extract_strided_slice %318 {offsets = [2, 0], sizes = [1, 2], strides = [1, 1]} : vector<8x2xf32> to vector<1x2xf32>
    %587 = vector.broadcast %586 : vector<1x2xf32> to vector<8x2xf32>
    %588 = arith.mulf %38, %587 : vector<8x2xf32>
    %589 = arith.addf %585, %588 : vector<8x2xf32>
    %590 = vector.extract_strided_slice %318 {offsets = [3, 0], sizes = [1, 2], strides = [1, 1]} : vector<8x2xf32> to vector<1x2xf32>
    %591 = vector.broadcast %590 : vector<1x2xf32> to vector<8x2xf32>
    %592 = arith.mulf %42, %591 : vector<8x2xf32>
    %593 = arith.addf %589, %592 : vector<8x2xf32>
    %594 = vector.extract_strided_slice %318 {offsets = [4, 0], sizes = [1, 2], strides = [1, 1]} : vector<8x2xf32> to vector<1x2xf32>
    %595 = vector.broadcast %594 : vector<1x2xf32> to vector<8x2xf32>
    %596 = arith.mulf %46, %595 : vector<8x2xf32>
    %597 = arith.addf %593, %596 : vector<8x2xf32>
    %598 = vector.extract_strided_slice %318 {offsets = [5, 0], sizes = [1, 2], strides = [1, 1]} : vector<8x2xf32> to vector<1x2xf32>
    %599 = vector.broadcast %598 : vector<1x2xf32> to vector<8x2xf32>
    %600 = arith.mulf %50, %599 : vector<8x2xf32>
    %601 = arith.addf %597, %600 : vector<8x2xf32>
    %602 = vector.extract_strided_slice %318 {offsets = [6, 0], sizes = [1, 2], strides = [1, 1]} : vector<8x2xf32> to vector<1x2xf32>
    %603 = vector.broadcast %602 : vector<1x2xf32> to vector<8x2xf32>
    %604 = arith.mulf %54, %603 : vector<8x2xf32>
    %605 = arith.addf %601, %604 : vector<8x2xf32>
    %606 = vector.extract_strided_slice %318 {offsets = [7, 0], sizes = [1, 2], strides = [1, 1]} : vector<8x2xf32> to vector<1x2xf32>
    %607 = vector.broadcast %606 : vector<1x2xf32> to vector<8x2xf32>
    %608 = arith.mulf %58, %607 : vector<8x2xf32>
    %609 = arith.addf %605, %608 : vector<8x2xf32>
    %c0_144 = arith.constant 0 : index
    %c5_145 = arith.constant 5 : index
    %610 = memref.load %arg5[%c0_144, %c5_145] : memref<1x8xf32, #tpu.memory_space<smem>>
    %611 = vector.broadcast %610 : f32 to vector<8x2xf32>
    %612 = arith.mulf %609, %611 : vector<8x2xf32>
    %613 = arith.addf %576, %612 : vector<8x2xf32>
    %614 = arith.mulf %26, %338 : vector<8x2xf32>
    %615 = vector.extract_strided_slice %338 {offsets = [0, 0], sizes = [1, 2], strides = [1, 1]} : vector<8x2xf32> to vector<1x2xf32>
    %616 = vector.broadcast %615 : vector<1x2xf32> to vector<8x2xf32>
    %617 = arith.mulf %30, %616 : vector<8x2xf32>
    %618 = arith.addf %614, %617 : vector<8x2xf32>
    %619 = vector.extract_strided_slice %338 {offsets = [1, 0], sizes = [1, 2], strides = [1, 1]} : vector<8x2xf32> to vector<1x2xf32>
    %620 = vector.broadcast %619 : vector<1x2xf32> to vector<8x2xf32>
    %621 = arith.mulf %34, %620 : vector<8x2xf32>
    %622 = arith.addf %618, %621 : vector<8x2xf32>
    %623 = vector.extract_strided_slice %338 {offsets = [2, 0], sizes = [1, 2], strides = [1, 1]} : vector<8x2xf32> to vector<1x2xf32>
    %624 = vector.broadcast %623 : vector<1x2xf32> to vector<8x2xf32>
    %625 = arith.mulf %38, %624 : vector<8x2xf32>
    %626 = arith.addf %622, %625 : vector<8x2xf32>
    %627 = vector.extract_strided_slice %338 {offsets = [3, 0], sizes = [1, 2], strides = [1, 1]} : vector<8x2xf32> to vector<1x2xf32>
    %628 = vector.broadcast %627 : vector<1x2xf32> to vector<8x2xf32>
    %629 = arith.mulf %42, %628 : vector<8x2xf32>
    %630 = arith.addf %626, %629 : vector<8x2xf32>
    %631 = vector.extract_strided_slice %338 {offsets = [4, 0], sizes = [1, 2], strides = [1, 1]} : vector<8x2xf32> to vector<1x2xf32>
    %632 = vector.broadcast %631 : vector<1x2xf32> to vector<8x2xf32>
    %633 = arith.mulf %46, %632 : vector<8x2xf32>
    %634 = arith.addf %630, %633 : vector<8x2xf32>
    %635 = vector.extract_strided_slice %338 {offsets = [5, 0], sizes = [1, 2], strides = [1, 1]} : vector<8x2xf32> to vector<1x2xf32>
    %636 = vector.broadcast %635 : vector<1x2xf32> to vector<8x2xf32>
    %637 = arith.mulf %50, %636 : vector<8x2xf32>
    %638 = arith.addf %634, %637 : vector<8x2xf32>
    %639 = vector.extract_strided_slice %338 {offsets = [6, 0], sizes = [1, 2], strides = [1, 1]} : vector<8x2xf32> to vector<1x2xf32>
    %640 = vector.broadcast %639 : vector<1x2xf32> to vector<8x2xf32>
    %641 = arith.mulf %54, %640 : vector<8x2xf32>
    %642 = arith.addf %638, %641 : vector<8x2xf32>
    %643 = vector.extract_strided_slice %338 {offsets = [7, 0], sizes = [1, 2], strides = [1, 1]} : vector<8x2xf32> to vector<1x2xf32>
    %644 = vector.broadcast %643 : vector<1x2xf32> to vector<8x2xf32>
    %645 = arith.mulf %58, %644 : vector<8x2xf32>
    %646 = arith.addf %642, %645 : vector<8x2xf32>
    %c0_146 = arith.constant 0 : index
    %c6_147 = arith.constant 6 : index
    %647 = memref.load %arg5[%c0_146, %c6_147] : memref<1x8xf32, #tpu.memory_space<smem>>
    %648 = vector.broadcast %647 : f32 to vector<8x2xf32>
    %649 = arith.mulf %646, %648 : vector<8x2xf32>
    %650 = arith.addf %613, %649 : vector<8x2xf32>
    %651 = arith.mulf %26, %358 : vector<8x2xf32>
    %652 = vector.extract_strided_slice %358 {offsets = [0, 0], sizes = [1, 2], strides = [1, 1]} : vector<8x2xf32> to vector<1x2xf32>
    %653 = vector.broadcast %652 : vector<1x2xf32> to vector<8x2xf32>
    %654 = arith.mulf %30, %653 : vector<8x2xf32>
    %655 = arith.addf %651, %654 : vector<8x2xf32>
    %656 = vector.extract_strided_slice %358 {offsets = [1, 0], sizes = [1, 2], strides = [1, 1]} : vector<8x2xf32> to vector<1x2xf32>
    %657 = vector.broadcast %656 : vector<1x2xf32> to vector<8x2xf32>
    %658 = arith.mulf %34, %657 : vector<8x2xf32>
    %659 = arith.addf %655, %658 : vector<8x2xf32>
    %660 = vector.extract_strided_slice %358 {offsets = [2, 0], sizes = [1, 2], strides = [1, 1]} : vector<8x2xf32> to vector<1x2xf32>
    %661 = vector.broadcast %660 : vector<1x2xf32> to vector<8x2xf32>
    %662 = arith.mulf %38, %661 : vector<8x2xf32>
    %663 = arith.addf %659, %662 : vector<8x2xf32>
    %664 = vector.extract_strided_slice %358 {offsets = [3, 0], sizes = [1, 2], strides = [1, 1]} : vector<8x2xf32> to vector<1x2xf32>
    %665 = vector.broadcast %664 : vector<1x2xf32> to vector<8x2xf32>
    %666 = arith.mulf %42, %665 : vector<8x2xf32>
    %667 = arith.addf %663, %666 : vector<8x2xf32>
    %668 = vector.extract_strided_slice %358 {offsets = [4, 0], sizes = [1, 2], strides = [1, 1]} : vector<8x2xf32> to vector<1x2xf32>
    %669 = vector.broadcast %668 : vector<1x2xf32> to vector<8x2xf32>
    %670 = arith.mulf %46, %669 : vector<8x2xf32>
    %671 = arith.addf %667, %670 : vector<8x2xf32>
    %672 = vector.extract_strided_slice %358 {offsets = [5, 0], sizes = [1, 2], strides = [1, 1]} : vector<8x2xf32> to vector<1x2xf32>
    %673 = vector.broadcast %672 : vector<1x2xf32> to vector<8x2xf32>
    %674 = arith.mulf %50, %673 : vector<8x2xf32>
    %675 = arith.addf %671, %674 : vector<8x2xf32>
    %676 = vector.extract_strided_slice %358 {offsets = [6, 0], sizes = [1, 2], strides = [1, 1]} : vector<8x2xf32> to vector<1x2xf32>
    %677 = vector.broadcast %676 : vector<1x2xf32> to vector<8x2xf32>
    %678 = arith.mulf %54, %677 : vector<8x2xf32>
    %679 = arith.addf %675, %678 : vector<8x2xf32>
    %680 = vector.extract_strided_slice %358 {offsets = [7, 0], sizes = [1, 2], strides = [1, 1]} : vector<8x2xf32> to vector<1x2xf32>
    %681 = vector.broadcast %680 : vector<1x2xf32> to vector<8x2xf32>
    %682 = arith.mulf %58, %681 : vector<8x2xf32>
    %683 = arith.addf %679, %682 : vector<8x2xf32>
    %c0_148 = arith.constant 0 : index
    %c7_149 = arith.constant 7 : index
    %684 = memref.load %arg5[%c0_148, %c7_149] : memref<1x8xf32, #tpu.memory_space<smem>>
    %685 = vector.broadcast %684 : f32 to vector<8x2xf32>
    %686 = arith.mulf %683, %685 : vector<8x2xf32>
    %687 = arith.addf %650, %686 : vector<8x2xf32>
    %688 = vector.broadcast %359 : f32 to vector<8x2xf32>
    %689 = arith.addf %687, %688 : vector<8x2xf32>
    %c0_150 = arith.constant 0 : index
    %c0_151 = arith.constant 0 : index
    %690 = vector.load %arg6[%c0_150, %c0_151] : memref<8x1xf32, #tpu.memory_space<vmem>>, vector<8x1xf32>
    %691 = math.exp %689 : vector<8x2xf32>
    %692 = vector.broadcast %690 : vector<8x1xf32> to vector<8x2xf32>
    %693 = arith.mulf %692, %691 : vector<8x2xf32>
    %694 = arith.addf %392, %693 : vector<8x2xf32>
    %695 = vector.extract_strided_slice %694 {offsets = [0, 0], sizes = [1, 2], strides = [1, 1]} : vector<8x2xf32> to vector<1x2xf32>
    %696 = vector.broadcast %695 : vector<1x2xf32> to vector<8x2xf32>
    %697 = arith.mulf %696, %694 : vector<8x2xf32>
    %698 = arith.negf %697 : vector<8x2xf32>
    %699 = math.exp %698 : vector<8x2xf32>
    %cst_152 = arith.constant 1.000000e+00 : f32
    %700 = vector.broadcast %cst_152 : f32 to vector<8x2xf32>
    %701 = arith.addf %700, %699 : vector<8x2xf32>
    %702 = arith.divf %700, %701 : vector<8x2xf32>
    %703 = vector.extract_strided_slice %694 {offsets = [1, 0], sizes = [1, 2], strides = [1, 1]} : vector<8x2xf32> to vector<1x2xf32>
    %704 = vector.broadcast %703 : vector<1x2xf32> to vector<8x2xf32>
    %705 = arith.mulf %704, %694 : vector<8x2xf32>
    %706 = arith.negf %705 : vector<8x2xf32>
    %707 = math.exp %706 : vector<8x2xf32>
    %cst_153 = arith.constant 1.000000e+00 : f32
    %708 = vector.broadcast %cst_153 : f32 to vector<8x2xf32>
    %709 = arith.addf %708, %707 : vector<8x2xf32>
    %710 = arith.divf %708, %709 : vector<8x2xf32>
    %711 = vector.extract_strided_slice %694 {offsets = [2, 0], sizes = [1, 2], strides = [1, 1]} : vector<8x2xf32> to vector<1x2xf32>
    %712 = vector.broadcast %711 : vector<1x2xf32> to vector<8x2xf32>
    %713 = arith.mulf %712, %694 : vector<8x2xf32>
    %714 = arith.negf %713 : vector<8x2xf32>
    %715 = math.exp %714 : vector<8x2xf32>
    %cst_154 = arith.constant 1.000000e+00 : f32
    %716 = vector.broadcast %cst_154 : f32 to vector<8x2xf32>
    %717 = arith.addf %716, %715 : vector<8x2xf32>
    %718 = arith.divf %716, %717 : vector<8x2xf32>
    %719 = vector.extract_strided_slice %694 {offsets = [3, 0], sizes = [1, 2], strides = [1, 1]} : vector<8x2xf32> to vector<1x2xf32>
    %720 = vector.broadcast %719 : vector<1x2xf32> to vector<8x2xf32>
    %721 = arith.mulf %720, %694 : vector<8x2xf32>
    %722 = arith.negf %721 : vector<8x2xf32>
    %723 = math.exp %722 : vector<8x2xf32>
    %cst_155 = arith.constant 1.000000e+00 : f32
    %724 = vector.broadcast %cst_155 : f32 to vector<8x2xf32>
    %725 = arith.addf %724, %723 : vector<8x2xf32>
    %726 = arith.divf %724, %725 : vector<8x2xf32>
    %727 = vector.extract_strided_slice %694 {offsets = [4, 0], sizes = [1, 2], strides = [1, 1]} : vector<8x2xf32> to vector<1x2xf32>
    %728 = vector.broadcast %727 : vector<1x2xf32> to vector<8x2xf32>
    %729 = arith.mulf %728, %694 : vector<8x2xf32>
    %730 = arith.negf %729 : vector<8x2xf32>
    %731 = math.exp %730 : vector<8x2xf32>
    %cst_156 = arith.constant 1.000000e+00 : f32
    %732 = vector.broadcast %cst_156 : f32 to vector<8x2xf32>
    %733 = arith.addf %732, %731 : vector<8x2xf32>
    %734 = arith.divf %732, %733 : vector<8x2xf32>
    %735 = vector.extract_strided_slice %694 {offsets = [5, 0], sizes = [1, 2], strides = [1, 1]} : vector<8x2xf32> to vector<1x2xf32>
    %736 = vector.broadcast %735 : vector<1x2xf32> to vector<8x2xf32>
    %737 = arith.mulf %736, %694 : vector<8x2xf32>
    %738 = arith.negf %737 : vector<8x2xf32>
    %739 = math.exp %738 : vector<8x2xf32>
    %cst_157 = arith.constant 1.000000e+00 : f32
    %740 = vector.broadcast %cst_157 : f32 to vector<8x2xf32>
    %741 = arith.addf %740, %739 : vector<8x2xf32>
    %742 = arith.divf %740, %741 : vector<8x2xf32>
    %743 = vector.extract_strided_slice %694 {offsets = [6, 0], sizes = [1, 2], strides = [1, 1]} : vector<8x2xf32> to vector<1x2xf32>
    %744 = vector.broadcast %743 : vector<1x2xf32> to vector<8x2xf32>
    %745 = arith.mulf %744, %694 : vector<8x2xf32>
    %746 = arith.negf %745 : vector<8x2xf32>
    %747 = math.exp %746 : vector<8x2xf32>
    %cst_158 = arith.constant 1.000000e+00 : f32
    %748 = vector.broadcast %cst_158 : f32 to vector<8x2xf32>
    %749 = arith.addf %748, %747 : vector<8x2xf32>
    %750 = arith.divf %748, %749 : vector<8x2xf32>
    %751 = vector.extract_strided_slice %694 {offsets = [7, 0], sizes = [1, 2], strides = [1, 1]} : vector<8x2xf32> to vector<1x2xf32>
    %752 = vector.broadcast %751 : vector<1x2xf32> to vector<8x2xf32>
    %753 = arith.mulf %752, %694 : vector<8x2xf32>
    %754 = arith.negf %753 : vector<8x2xf32>
    %755 = math.exp %754 : vector<8x2xf32>
    %cst_159 = arith.constant 1.000000e+00 : f32
    %756 = vector.broadcast %cst_159 : f32 to vector<8x2xf32>
    %757 = arith.addf %756, %755 : vector<8x2xf32>
    %758 = arith.divf %756, %757 : vector<8x2xf32>
    %759 = tpu.concatenate %702, %710, %718, %726, %734, %742, %750, %758 in 0 : vector<8x2xf32>, vector<8x2xf32>, vector<8x2xf32>, vector<8x2xf32>, vector<8x2xf32>, vector<8x2xf32>, vector<8x2xf32>, vector<8x2xf32> -> vector<64x2xf32>
    %c0_160 = arith.constant 0 : index
    %c0_161 = arith.constant 0 : index
    %760 = vector.load %arg8[%c0_160, %c0_161] : memref<64x2xf32, #tpu.memory_space<vmem>>, vector<64x2xf32>
    tpu.vector_store %arg8[%c0_160, %c0_161], %759 {strides = array<i32>} : memref<64x2xf32, #tpu.memory_space<vmem>>, vector<64x2xf32>,
    %761 = tpu.concatenate %392, %689, %694 in 0 : vector<8x2xf32>, vector<8x2xf32>, vector<8x2xf32> -> vector<24x2xf32>
    %c0_162 = arith.constant 0 : index
    %c0_163 = arith.constant 0 : index
    %762 = vector.load %arg9[%c0_162, %c0_163] : memref<24x2xf32, #tpu.memory_space<vmem>>, vector<24x2xf32>
    tpu.vector_store %arg9[%c0_162, %c0_163], %761 {strides = array<i32>} : memref<24x2xf32, #tpu.memory_space<vmem>>, vector<24x2xf32>,
    return
  }
  func.func @transform_0(%arg0: i32) -> (i32, i32, i32) {
    %c0_i32 = arith.constant 0 : i32
    %c0_i32_0 = arith.constant 0 : i32
    %c0_i32_1 = arith.constant 0 : i32
    return %c0_i32, %c0_i32_0, %arg0 : i32, i32, i32
  }
  func.func @transform_1(%arg0: i32) -> (i32, i32, i32) {
    %c0_i32 = arith.constant 0 : i32
    %c0_i32_0 = arith.constant 0 : i32
    %c0_i32_1 = arith.constant 0 : i32
    return %c0_i32, %c0_i32_0, %arg0 : i32, i32, i32
  }
  func.func @transform_2(%arg0: i32) -> (i32, i32) {
    %c0_i32 = arith.constant 0 : i32
    %c0_i32_0 = arith.constant 0 : i32
    %c0_i32_1 = arith.constant 0 : i32
    return %c0_i32, %c0_i32_0 : i32, i32
  }
  func.func @transform_3(%arg0: i32) -> (i32, i32) {
    %c0_i32 = arith.constant 0 : i32
    %c0_i32_0 = arith.constant 0 : i32
    %c0_i32_1 = arith.constant 0 : i32
    return %c0_i32, %c0_i32_0 : i32, i32
  }
  func.func @transform_4(%arg0: i32) -> (i32, i32) {
    %c0_i32 = arith.constant 0 : i32
    %c0_i32_0 = arith.constant 0 : i32
    %c0_i32_1 = arith.constant 0 : i32
    return %c0_i32, %c0_i32_0 : i32, i32
  }
  func.func @transform_5(%arg0: i32) -> (i32, i32) {
    %c0_i32 = arith.constant 0 : i32
    %c0_i32_0 = arith.constant 0 : i32
    %c0_i32_1 = arith.constant 0 : i32
    return %c0_i32, %c0_i32_0 : i32, i32
  }
  func.func @transform_6(%arg0: i32) -> (i32, i32) {
    %c0_i32 = arith.constant 0 : i32
    %c0_i32_0 = arith.constant 0 : i32
    %c0_i32_1 = arith.constant 0 : i32
    return %c0_i32, %c0_i32_0 : i32, i32
  }
  func.func @transform_7(%arg0: i32) -> (i32, i32) {
    %c0_i32 = arith.constant 0 : i32
    %c0_i32_0 = arith.constant 0 : i32
    return %c0_i32, %arg0 : i32, i32
  }
  func.func @transform_8(%arg0: i32) -> (i32, i32) {
    %c0_i32 = arith.constant 0 : i32
    %c0_i32_0 = arith.constant 0 : i32
    return %c0_i32, %arg0 : i32, i32
  }
}

</mosaic_0001>

<llo_original>
// kernel: tpu_custom_call.1
$region0: #{tpu_custom_call.1}
  #allocation0 [shape = 'u32[]', space=smem, size = 0x4, offset = 0x4, fixed_abs, tag = 'smem constant byte address 0x4 - core index']
  #allocation1 [shape = 'u32[144,128]{1,0:T(1,128)}', space=vmem, size = 0x12000, scoped, tag = 'internal scratch']
  #allocation2 [shape = 'f32[1,1]{1,0:T(1,128)S(6)}', space=smem, size = 0x200, scoped, tag = 'scoped memory for tpu_custom_call.1']
  %s0 = inlined_call_operand.vmem [shape: f32[8,8,2], index: 0, kind: input, shape index: {}]
  %s1 = inlined_call_operand.vmem [shape: f32[4,8,2], index: 1, kind: input, shape index: {}]
  %s2 = inlined_call_operand.vmem [shape: f32[4,8], index: 2, kind: input, shape index: {}]
  %s3 = inlined_call_operand.vmem [shape: f32[1,8], index: 3, kind: input, shape index: {}]
  %s4 = inlined_call_operand.vmem [shape: f32[1,8], index: 4, kind: input, shape index: {}]
  %s5 = inlined_call_operand.vmem [shape: f32[8,1], index: 5, kind: input, shape index: {}]
  %s6 = inlined_call_operand.<no memory space> [shape: f32[1,1], index: 6, kind: input, shape index: {}]
  %s7 = inlined_call_operand.vmem [shape: f32[64,2], index: 7, kind: output, shape index: {0}]
  %s8 = inlined_call_operand.vmem [shape: f32[24,2], index: 8, kind: output, shape index: {1}]
  %9 = xla_tuple %s7, %s8
  %s10 = sld [smem:[#allocation0]]
  $region58: #{tpu_custom_call.1} parent=0
    _
  %s12 = ssub.s32 1, %s10
  %s13 = scalar_select 0, %s12, %s10
  %14 = sst [smem:[#allocation2]] %s6
  $region1: #{tpu_custom_call.1} parent=0
    #allocation3 [shape = 'u8[2048]{0}', space=smem, size = 0x800, scoped, tag = 'input window, operand 2, single buffered']
    #allocation4 [shape = 's32[1]{0}', space=sflag, size = 0x4, scoped, tag = 'scoped memory for tpu_custom_call.1']
    #allocation5 [shape = 'u8[512]{0}', space=smem, size = 0x200, scoped, tag = 'input window, operand 3, single buffered']
    #allocation6 [shape = 's32[1]{0}', space=sflag, size = 0x4, scoped, tag = 'scoped memory for tpu_custom_call.1']
    #allocation7 [shape = 'u8[512]{0}', space=smem, size = 0x200, scoped, tag = 'input window, operand 4, single buffered']
    %15 = vsyncpa [#allocation4], 0
    %16 = vsyncpa [#allocation6], 0
    // Predicated region
    $region2: #{tpu_custom_call.1} parent=1 // pred_check
      _
    $region3: #{tpu_custom_call.1} parent=1 // pred_check_branch
      %18 = sbr.rel (0) target = $region5
    $region4: #{tpu_custom_call.1} parent=1 // pred_region
      _
    $region5: #{tpu_custom_call.1} parent=1 // pred_fallthru
      _
    // Predicated region
    $region6: #{tpu_custom_call.1} parent=1 // pred_check
      _
    $region7: #{tpu_custom_call.1} parent=1 // pred_check_branch
      %20 = sbr.rel (0) target = $region9
    $region8: #{tpu_custom_call.1} parent=1 // pred_region
      _
    $region9: #{tpu_custom_call.1} parent=1 // pred_fallthru
      _
    // Predicated region
    $region10: #{tpu_custom_call.1} parent=1 // pred_check
      _
    $region11: #{tpu_custom_call.1} parent=1 // pred_check_branch
      %22 = sbr.rel (0) target = $region13
    $region12: #{tpu_custom_call.1} parent=1 // pred_region
      %s24 = ssub.s32 64, 64
      %25 = vsyncadd [#allocation4], %s24
      %s27 = sshll.u32 %s2, 4
      %s28 = int_to_ptr.vmem [resolvable:$true] %s27
      %30 = dma.vmem_to_smem %s28, 64, [#allocation3], [#allocation4]
    $region13: #{tpu_custom_call.1} parent=1 // pred_fallthru
      _
    // Predicated region
    $region14: #{tpu_custom_call.1} parent=1 // pred_check
      _
    $region15: #{tpu_custom_call.1} parent=1 // pred_check_branch
      %32 = sbr.rel (0) target = $region17
    $region16: #{tpu_custom_call.1} parent=1 // pred_region
      %s34 = ssub.s32 16, 16
      %35 = vsyncadd [#allocation6], %s34
      %s37 = sshll.u32 %s3, 4
      %s38 = int_to_ptr.vmem [resolvable:$true] %s37
      %40 = dma.vmem_to_smem %s38, 16, [#allocation5], [#allocation6]
    $region17: #{tpu_custom_call.1} parent=1 // pred_fallthru
      _
    // Predicated region
    $region18: #{tpu_custom_call.1} parent=1 // pred_check
      _
    $region19: #{tpu_custom_call.1} parent=1 // pred_check_branch
      %42 = sbr.rel (0) target = $region21
    $region20: #{tpu_custom_call.1} parent=1 // pred_region
      %s44 = ssub.s32 16, 16
      %45 = vsyncadd [#allocation6], %s44
      %s47 = sshll.u32 %s4, 4
      %s48 = int_to_ptr.vmem [resolvable:$true] %s47
      %50 = dma.vmem_to_smem %s48, 16, [#allocation7], [#allocation6]
    $region21: #{tpu_custom_call.1} parent=1 // pred_fallthru
      _
    // Predicated region
    $region22: #{tpu_custom_call.1} parent=1 // pred_check
      _
    $region23: #{tpu_custom_call.1} parent=1 // pred_check_branch
      %52 = sbr.rel (0) target = $region25
    $region24: #{tpu_custom_call.1} parent=1 // pred_region
      _
    $region25: #{tpu_custom_call.1} parent=1 // pred_fallthru
      _
    // Predicated region
    $region26: #{tpu_custom_call.1} parent=1 // pred_check
      _
    $region27: #{tpu_custom_call.1} parent=1 // pred_check_branch
      %54 = sbr.rel (0) target = $region29
    $region28: #{tpu_custom_call.1} parent=1 // pred_region
      _
    $region29: #{tpu_custom_call.1} parent=1 // pred_fallthru
      _
    // Predicated region
    $region30: #{tpu_custom_call.1} parent=1 // pred_check
      _
    $region31: #{tpu_custom_call.1} parent=1 // pred_check_branch
      %56 = sbr.rel (0) target = $region33
    $region32: #{tpu_custom_call.1} parent=1 // pred_region
      %57 = dma.done [#allocation4], 64
    $region33: #{tpu_custom_call.1} parent=1 // pred_fallthru
      _
    // Predicated region
    $region34: #{tpu_custom_call.1} parent=1 // pred_check
      _
    $region35: #{tpu_custom_call.1} parent=1 // pred_check_branch
      %59 = sbr.rel (0) target = $region37
    $region36: #{tpu_custom_call.1} parent=1 // pred_region
      %60 = dma.done [#allocation6], 16
    $region37: #{tpu_custom_call.1} parent=1 // pred_fallthru
      _
    // Predicated region
    $region38: #{tpu_custom_call.1} parent=1 // pred_check
      _
    $region39: #{tpu_custom_call.1} parent=1 // pred_check_branch
      %62 = sbr.rel (0) target = $region41
    $region40: #{tpu_custom_call.1} parent=1 // pred_region
      %63 = dma.done [#allocation6], 16
    $region41: #{tpu_custom_call.1} parent=1 // pred_fallthru
      _
    %64 = sfence
    %v65 = vld [vmem:[%s0] sm:$0xff]
    %s66 = scalar_lea.vmem %s0, 8
    %v67 = vld [vmem:[%s66] sm:$0xff]
    %s68 = scalar_lea.vmem %s0, 16
    %v69 = vld [vmem:[%s68] sm:$0xff]
    %s70 = scalar_lea.vmem %s0, 24
    %v71 = vld [vmem:[%s70] sm:$0xff]
    %s72 = scalar_lea.vmem %s0, 32
    %v73 = vld [vmem:[%s72] sm:$0xff]
    %s74 = scalar_lea.vmem %s0, 40
    %v75 = vld [vmem:[%s74] sm:$0xff]
    %s76 = scalar_lea.vmem %s0, 48
    %v77 = vld [vmem:[%s76] sm:$0xff]
    %s78 = scalar_lea.vmem %s0, 56
    %v79 = vld [vmem:[%s78] sm:$0xff]
    %v80 = vadd.f32 %v65, %v67
    %v81 = vadd.f32 %v80, %v69
    %v82 = vadd.f32 %v81, %v71
    %v83 = vadd.f32 %v82, %v73
    %v84 = vadd.f32 %v83, %v75
    %v85 = vadd.f32 %v84, %v77
    %v86 = vadd.f32 %v85, %v79
    %v87 = vadd.f32 %v86, 1.0
    %v88 = vrsqrt.pop %v87
    %v89 = vmul.f32 %v88, %v88
    %v90 = vmul.f32 %v88, %v65
    %v91 = vlaneseq
    %v92 = vshrl.u32 %v91, 7
    %v93 = vsub.s32 0, %v92
    %v94 = vrot.slane %v88, %v93
    %v95 = vmul.f32 %v90, %v94
    %v96 = vmul.f32 %v88, %v67
    %v97 = vlaneseq
    %v98 = vshrl.u32 %v97, 7
    %v99 = vsub.s32 1, %v98
    %v100 = vrot.slane %v88, %v99
    %v101 = vmul.f32 %v96, %v100
    %v102 = vmul.f32 %v88, %v69
    %v103 = vlaneseq
    %v104 = vshrl.u32 %v103, 7
    %v105 = vsub.s32 2, %v104
    %v106 = vrot.slane %v88, %v105
    %v107 = vmul.f32 %v102, %v106
    %v108 = vmul.f32 %v88, %v71
    %v109 = vlaneseq
    %v110 = vshrl.u32 %v109, 7
    %v111 = vsub.s32 3, %v110
    %v112 = vrot.slane %v88, %v111
    %v113 = vmul.f32 %v108, %v112
    %v114 = vmul.f32 %v88, %v73
    %v115 = vlaneseq
    %v116 = vshrl.u32 %v115, 7
    %v117 = vsub.s32 4, %v116
    %v118 = vrot.slane %v88, %v117
    %v119 = vmul.f32 %v114, %v118
    %v120 = vmul.f32 %v88, %v75
    %v121 = vlaneseq
    %v122 = vshrl.u32 %v121, 7
    %v123 = vsub.s32 5, %v122
    %v124 = vrot.slane %v88, %v123
    %v125 = vmul.f32 %v120, %v124
    %v126 = vmul.f32 %v88, %v77
    %v127 = vlaneseq
    %v128 = vshrl.u32 %v127, 7
    %v129 = vsub.s32 6, %v128
    %v130 = vrot.slane %v88, %v129
    %v131 = vmul.f32 %v126, %v130
    %v132 = vmul.f32 %v88, %v79
    %v133 = vlaneseq
    %v134 = vshrl.u32 %v133, 7
    %v135 = vsub.s32 7, %v134
    %v136 = vrot.slane %v88, %v135
    %v137 = vmul.f32 %v132, %v136
    %v138 = vld [vmem:[%s1] sm:$0xff]
    %v139 = vmul.f32 %v89, %v138
    %v140 = vlaneseq
    %v141 = vshrl.u32 %v140, 7
    %v142 = vsub.s32 0, %v141
    %v143 = vrot.slane %v138, %v142
    %v144 = vmul.f32 %v95, %v143
    %v145 = vadd.f32 %v139, %v144
    %v146 = vlaneseq
    %v147 = vshrl.u32 %v146, 7
    %v148 = vsub.s32 1, %v147
    %v149 = vrot.slane %v138, %v148
    %v150 = vmul.f32 %v101, %v149
    %v151 = vadd.f32 %v145, %v150
    %v152 = vlaneseq
    %v153 = vshrl.u32 %v152, 7
    %v154 = vsub.s32 2, %v153
    %v155 = vrot.slane %v138, %v154
    %v156 = vmul.f32 %v107, %v155
    %v157 = vadd.f32 %v151, %v156
    %v158 = vlaneseq
    %v159 = vshrl.u32 %v158, 7
    %v160 = vsub.s32 3, %v159
    %v161 = vrot.slane %v138, %v160
    %v162 = vmul.f32 %v113, %v161
    %v163 = vadd.f32 %v157, %v162
    %v164 = vlaneseq
    %v165 = vshrl.u32 %v164, 7
    %v166 = vsub.s32 4, %v165
    %v167 = vrot.slane %v138, %v166
    %v168 = vmul.f32 %v119, %v167
    %v169 = vadd.f32 %v163, %v168
    %v170 = vlaneseq
    %v171 = vshrl.u32 %v170, 7
    %v172 = vsub.s32 5, %v171
    %v173 = vrot.slane %v138, %v172
    %v174 = vmul.f32 %v125, %v173
    %v175 = vadd.f32 %v169, %v174
    %v176 = vlaneseq
    %v177 = vshrl.u32 %v176, 7
    %v178 = vsub.s32 6, %v177
    %v179 = vrot.slane %v138, %v178
    %v180 = vmul.f32 %v131, %v179
    %v181 = vadd.f32 %v175, %v180
    %v182 = vlaneseq
    %v183 = vshrl.u32 %v182, 7
    %v184 = vsub.s32 7, %v183
    %v185 = vrot.slane %v138, %v184
    %v186 = vmul.f32 %v137, %v185
    %v187 = vadd.f32 %v181, %v186
    %s188 = scalar_lea.vmem %s1, 8
    %v189 = vld [vmem:[%s188] sm:$0xff]
    %v190 = vmul.f32 %v89, %v189
    %v191 = vlaneseq
    %v192 = vshrl.u32 %v191, 7
    %v193 = vsub.s32 0, %v192
    %v194 = vrot.slane %v189, %v193
    %v195 = vmul.f32 %v95, %v194
    %v196 = vadd.f32 %v190, %v195
    %v197 = vlaneseq
    %v198 = vshrl.u32 %v197, 7
    %v199 = vsub.s32 1, %v198
    %v200 = vrot.slane %v189, %v199
    %v201 = vmul.f32 %v101, %v200
    %v202 = vadd.f32 %v196, %v201
    %v203 = vlaneseq
    %v204 = vshrl.u32 %v203, 7
    %v205 = vsub.s32 2, %v204
    %v206 = vrot.slane %v189, %v205
    %v207 = vmul.f32 %v107, %v206
    %v208 = vadd.f32 %v202, %v207
    %v209 = vlaneseq
    %v210 = vshrl.u32 %v209, 7
    %v211 = vsub.s32 3, %v210
    %v212 = vrot.slane %v189, %v211
    %v213 = vmul.f32 %v113, %v212
    %v214 = vadd.f32 %v208, %v213
    %v215 = vlaneseq
    %v216 = vshrl.u32 %v215, 7
    %v217 = vsub.s32 4, %v216
    %v218 = vrot.slane %v189, %v217
    %v219 = vmul.f32 %v119, %v218
    %v220 = vadd.f32 %v214, %v219
    %v221 = vlaneseq
    %v222 = vshrl.u32 %v221, 7
    %v223 = vsub.s32 5, %v222
    %v224 = vrot.slane %v189, %v223
    %v225 = vmul.f32 %v125, %v224
    %v226 = vadd.f32 %v220, %v225
    %v227 = vlaneseq
    %v228 = vshrl.u32 %v227, 7
    %v229 = vsub.s32 6, %v228
    %v230 = vrot.slane %v189, %v229
    %v231 = vmul.f32 %v131, %v230
    %v232 = vadd.f32 %v226, %v231
    %v233 = vlaneseq
    %v234 = vshrl.u32 %v233, 7
    %v235 = vsub.s32 7, %v234
    %v236 = vrot.slane %v189, %v235
    %v237 = vmul.f32 %v137, %v236
    %v238 = vadd.f32 %v232, %v237
    %s239 = scalar_lea.vmem %s1, 16
    %v240 = vld [vmem:[%s239] sm:$0xff]
    %v241 = vmul.f32 %v89, %v240
    %v242 = vlaneseq
    %v243 = vshrl.u32 %v242, 7
    %v244 = vsub.s32 0, %v243
    %v245 = vrot.slane %v240, %v244
    %v246 = vmul.f32 %v95, %v245
    %v247 = vadd.f32 %v241, %v246
    %v248 = vlaneseq
    %v249 = vshrl.u32 %v248, 7
    %v250 = vsub.s32 1, %v249
    %v251 = vrot.slane %v240, %v250
    %v252 = vmul.f32 %v101, %v251
    %v253 = vadd.f32 %v247, %v252
    %v254 = vlaneseq
    %v255 = vshrl.u32 %v254, 7
    %v256 = vsub.s32 2, %v255
    %v257 = vrot.slane %v240, %v256
    %v258 = vmul.f32 %v107, %v257
    %v259 = vadd.f32 %v253, %v258
    %v260 = vlaneseq
    %v261 = vshrl.u32 %v260, 7
    %v262 = vsub.s32 3, %v261
    %v263 = vrot.slane %v240, %v262
    %v264 = vmul.f32 %v113, %v263
    %v265 = vadd.f32 %v259, %v264
    %v266 = vlaneseq
    %v267 = vshrl.u32 %v266, 7
    %v268 = vsub.s32 4, %v267
    %v269 = vrot.slane %v240, %v268
    %v270 = vmul.f32 %v119, %v269
    %v271 = vadd.f32 %v265, %v270
    %v272 = vlaneseq
    %v273 = vshrl.u32 %v272, 7
    %v274 = vsub.s32 5, %v273
    %v275 = vrot.slane %v240, %v274
    %v276 = vmul.f32 %v125, %v275
    %v277 = vadd.f32 %v271, %v276
    %v278 = vlaneseq
    %v279 = vshrl.u32 %v278, 7
    %v280 = vsub.s32 6, %v279
    %v281 = vrot.slane %v240, %v280
    %v282 = vmul.f32 %v131, %v281
    %v283 = vadd.f32 %v277, %v282
    %v284 = vlaneseq
    %v285 = vshrl.u32 %v284, 7
    %v286 = vsub.s32 7, %v285
    %v287 = vrot.slane %v240, %v286
    %v288 = vmul.f32 %v137, %v287
    %v289 = vadd.f32 %v283, %v288
    %s290 = scalar_lea.vmem %s1, 24
    %v291 = vld [vmem:[%s290] sm:$0xff]
    %v292 = vmul.f32 %v89, %v291
    %v293 = vlaneseq
    %v294 = vshrl.u32 %v293, 7
    %v295 = vsub.s32 0, %v294
    %v296 = vrot.slane %v291, %v295
    %v297 = vmul.f32 %v95, %v296
    %v298 = vadd.f32 %v292, %v297
    %v299 = vlaneseq
    %v300 = vshrl.u32 %v299, 7
    %v301 = vsub.s32 1, %v300
    %v302 = vrot.slane %v291, %v301
    %v303 = vmul.f32 %v101, %v302
    %v304 = vadd.f32 %v298, %v303
    %v305 = vlaneseq
    %v306 = vshrl.u32 %v305, 7
    %v307 = vsub.s32 2, %v306
    %v308 = vrot.slane %v291, %v307
    %v309 = vmul.f32 %v107, %v308
    %v310 = vadd.f32 %v304, %v309
    %v311 = vlaneseq
    %v312 = vshrl.u32 %v311, 7
    %v313 = vsub.s32 3, %v312
    %v314 = vrot.slane %v291, %v313
    %v315 = vmul.f32 %v113, %v314
    %v316 = vadd.f32 %v310, %v315
    %v317 = vlaneseq
    %v318 = vshrl.u32 %v317, 7
    %v319 = vsub.s32 4, %v318
    %v320 = vrot.slane %v291, %v319
    %v321 = vmul.f32 %v119, %v320
    %v322 = vadd.f32 %v316, %v321
    %v323 = vlaneseq
    %v324 = vshrl.u32 %v323, 7
    %v325 = vsub.s32 5, %v324
    %v326 = vrot.slane %v291, %v325
    %v327 = vmul.f32 %v125, %v326
    %v328 = vadd.f32 %v322, %v327
    %v329 = vlaneseq
    %v330 = vshrl.u32 %v329, 7
    %v331 = vsub.s32 6, %v330
    %v332 = vrot.slane %v291, %v331
    %v333 = vmul.f32 %v131, %v332
    %v334 = vadd.f32 %v328, %v333
    %v335 = vlaneseq
    %v336 = vshrl.u32 %v335, 7
    %v337 = vsub.s32 7, %v336
    %v338 = vrot.slane %v291, %v337
    %v339 = vmul.f32 %v137, %v338
    %v340 = vadd.f32 %v334, %v339
    %s341 = sld [smem:[#allocation3]]
    %v342 = vstv %s341
    %v343 = vmul.f32 %v187, %v342
    %s344 = sld [smem:[#allocation3 + $0x80]]
    %v345 = vstv %s344
    %v346 = vmul.f32 %v238, %v345
    %v347 = vadd.f32 %v343, %v346
    %s348 = sld [smem:[#allocation3 + $0x100]]
    %v349 = vstv %s348
    %v350 = vmul.f32 %v289, %v349
    %v351 = vadd.f32 %v347, %v350
    %s352 = sld [smem:[#allocation3 + $0x180]]
    %v353 = vstv %s352
    %v354 = vmul.f32 %v340, %v353
    %v355 = vadd.f32 %v351, %v354
    %s356 = sld [smem:[#allocation5]]
    %v357 = vstv %s356
    %v358 = vadd.f32 %v355, %v357
    %v359 = vmax.f32 %v358, 0.0
    %s360 = sld [smem:[#allocation3 + $0x1]]
    %v361 = vstv %s360
    %v362 = vmul.f32 %v187, %v361
    %s363 = sld [smem:[#allocation3 + $0x81]]
    %v364 = vstv %s363
    %v365 = vmul.f32 %v238, %v364
    %v366 = vadd.f32 %v362, %v365
    %s367 = sld [smem:[#allocation3 + $0x101]]
    %v368 = vstv %s367
    %v369 = vmul.f32 %v289, %v368
    %v370 = vadd.f32 %v366, %v369
    %s371 = sld [smem:[#allocation3 + $0x181]]
    %v372 = vstv %s371
    %v373 = vmul.f32 %v340, %v372
    %v374 = vadd.f32 %v370, %v373
    %s375 = sld [smem:[#allocation5 + $0x1]]
    %v376 = vstv %s375
    %v377 = vadd.f32 %v374, %v376
    %v378 = vmax.f32 %v377, 0.0
    %s379 = sld [smem:[#allocation3 + $0x2]]
    %v380 = vstv %s379
    %v381 = vmul.f32 %v187, %v380
    %s382 = sld [smem:[#allocation3 + $0x82]]
    %v383 = vstv %s382
    %v384 = vmul.f32 %v238, %v383
    %v385 = vadd.f32 %v381, %v384
    %s386 = sld [smem:[#allocation3 + $0x102]]
    %v387 = vstv %s386
    %v388 = vmul.f32 %v289, %v387
    %v389 = vadd.f32 %v385, %v388
    %s390 = sld [smem:[#allocation3 + $0x182]]
    %v391 = vstv %s390
    %v392 = vmul.f32 %v340, %v391
    %v393 = vadd.f32 %v389, %v392
    %s394 = sld [smem:[#allocation5 + $0x2]]
    %v395 = vstv %s394
    %v396 = vadd.f32 %v393, %v395
    %v397 = vmax.f32 %v396, 0.0
    %s398 = sld [smem:[#allocation3 + $0x3]]
    %v399 = vstv %s398
    %v400 = vmul.f32 %v187, %v399
    %s401 = sld [smem:[#allocation3 + $0x83]]
    %v402 = vstv %s401
    %v403 = vmul.f32 %v238, %v402
    %v404 = vadd.f32 %v400, %v403
    %s405 = sld [smem:[#allocation3 + $0x103]]
    %v406 = vstv %s405
    %v407 = vmul.f32 %v289, %v406
    %v408 = vadd.f32 %v404, %v407
    %s409 = sld [smem:[#allocation3 + $0x183]]
    %v410 = vstv %s409
    %v411 = vmul.f32 %v340, %v410
    %v412 = vadd.f32 %v408, %v411
    %s413 = sld [smem:[#allocation5 + $0x3]]
    %v414 = vstv %s413
    %v415 = vadd.f32 %v412, %v414
    %v416 = vmax.f32 %v415, 0.0
    %s417 = sld [smem:[#allocation3 + $0x4]]
    %v418 = vstv %s417
    %v419 = vmul.f32 %v187, %v418
    %s420 = sld [smem:[#allocation3 + $0x84]]
    %v421 = vstv %s420
    %v422 = vmul.f32 %v238, %v421
    %v423 = vadd.f32 %v419, %v422
    %s424 = sld [smem:[#allocation3 + $0x104]]
    %v425 = vstv %s424
    %v426 = vmul.f32 %v289, %v425
    %v427 = vadd.f32 %v423, %v426
    %s428 = sld [smem:[#allocation3 + $0x184]]
    %v429 = vstv %s428
    %v430 = vmul.f32 %v340, %v429
    %v431 = vadd.f32 %v427, %v430
    %s432 = sld [smem:[#allocation5 + $0x4]]
    %v433 = vstv %s432
    %v434 = vadd.f32 %v431, %v433
    %v435 = vmax.f32 %v434, 0.0
    %s436 = sld [smem:[#allocation3 + $0x5]]
    %v437 = vstv %s436
    %v438 = vmul.f32 %v187, %v437
    %s439 = sld [smem:[#allocation3 + $0x85]]
    %v440 = vstv %s439
    %v441 = vmul.f32 %v238, %v440
    %v442 = vadd.f32 %v438, %v441
    %s443 = sld [smem:[#allocation3 + $0x105]]
    %v444 = vstv %s443
    %v445 = vmul.f32 %v289, %v444
    %v446 = vadd.f32 %v442, %v445
    %s447 = sld [smem:[#allocation3 + $0x185]]
    %v448 = vstv %s447
    %v449 = vmul.f32 %v340, %v448
    %v450 = vadd.f32 %v446, %v449
    %s451 = sld [smem:[#allocation5 + $0x5]]
    %v452 = vstv %s451
    %v453 = vadd.f32 %v450, %v452
    %v454 = vmax.f32 %v453, 0.0
    %s455 = sld [smem:[#allocation3 + $0x6]]
    %v456 = vstv %s455
    %v457 = vmul.f32 %v187, %v456
    %s458 = sld [smem:[#allocation3 + $0x86]]
    %v459 = vstv %s458
    %v460 = vmul.f32 %v238, %v459
    %v461 = vadd.f32 %v457, %v460
    %s462 = sld [smem:[#allocation3 + $0x106]]
    %v463 = vstv %s462
    %v464 = vmul.f32 %v289, %v463
    %v465 = vadd.f32 %v461, %v464
    %s466 = sld [smem:[#allocation3 + $0x186]]
    %v467 = vstv %s466
    %v468 = vmul.f32 %v340, %v467
    %v469 = vadd.f32 %v465, %v468
    %s470 = sld [smem:[#allocation5 + $0x6]]
    %v471 = vstv %s470
    %v472 = vadd.f32 %v469, %v471
    %v473 = vmax.f32 %v472, 0.0
    %s474 = sld [smem:[#allocation3 + $0x7]]
    %v475 = vstv %s474
    %v476 = vmul.f32 %v187, %v475
    %s477 = sld [smem:[#allocation3 + $0x87]]
    %v478 = vstv %s477
    %v479 = vmul.f32 %v238, %v478
    %v480 = vadd.f32 %v476, %v479
    %s481 = sld [smem:[#allocation3 + $0x107]]
    %v482 = vstv %s481
    %v483 = vmul.f32 %v289, %v482
    %v484 = vadd.f32 %v480, %v483
    %s485 = sld [smem:[#allocation3 + $0x187]]
    %v486 = vstv %s485
    %v487 = vmul.f32 %v340, %v486
    %v488 = vadd.f32 %v484, %v487
    %s489 = sld [smem:[#allocation5 + $0x7]]
    %v490 = vstv %s489
    %v491 = vadd.f32 %v488, %v490
    %v492 = vmax.f32 %v491, 0.0
    %s493 = sld [smem:[#allocation2]]
    %s494 = sld [smem:[#allocation7]]
    %v495 = vstv %s494
    %v496 = vmul.f32 %v359, %v495
    %s497 = sld [smem:[#allocation7 + $0x1]]
    %v498 = vstv %s497
    %v499 = vmul.f32 %v378, %v498
    %v500 = vadd.f32 %v496, %v499
    %s501 = sld [smem:[#allocation7 + $0x2]]
    %v502 = vstv %s501
    %v503 = vmul.f32 %v397, %v502
    %v504 = vadd.f32 %v500, %v503
    %s505 = sld [smem:[#allocation7 + $0x3]]
    %v506 = vstv %s505
    %v507 = vmul.f32 %v416, %v506
    %v508 = vadd.f32 %v504, %v507
    %s509 = sld [smem:[#allocation7 + $0x4]]
    %v510 = vstv %s509
    %v511 = vmul.f32 %v435, %v510
    %v512 = vadd.f32 %v508, %v511
    %s513 = sld [smem:[#allocation7 + $0x5]]
    %v514 = vstv %s513
    %v515 = vmul.f32 %v454, %v514
    %v516 = vadd.f32 %v512, %v515
    %s517 = sld [smem:[#allocation7 + $0x6]]
    %v518 = vstv %s517
    %v519 = vmul.f32 %v473, %v518
    %v520 = vadd.f32 %v516, %v519
    %s521 = sld [smem:[#allocation7 + $0x7]]
    %v522 = vstv %s521
    %v523 = vmul.f32 %v492, %v522
    %v524 = vadd.f32 %v520, %v523
    %v525 = vstv %s493
    %v526 = vadd.f32 %v524, %v525
    %v527 = vmul.f32 %v89, %v359
    %v528 = vlaneseq
    %v529 = vshrl.u32 %v528, 7
    %v530 = vsub.s32 0, %v529
    %v531 = vrot.slane %v359, %v530
    %v532 = vmul.f32 %v95, %v531
    %v533 = vadd.f32 %v527, %v532
    %v534 = vlaneseq
    %v535 = vshrl.u32 %v534, 7
    %v536 = vsub.s32 1, %v535
    %v537 = vrot.slane %v359, %v536
    %v538 = vmul.f32 %v101, %v537
    %v539 = vadd.f32 %v533, %v538
    %v540 = vlaneseq
    %v541 = vshrl.u32 %v540, 7
    %v542 = vsub.s32 2, %v541
    %v543 = vrot.slane %v359, %v542
    %v544 = vmul.f32 %v107, %v543
    %v545 = vadd.f32 %v539, %v544
    %v546 = vlaneseq
    %v547 = vshrl.u32 %v546, 7
    %v548 = vsub.s32 3, %v547
    %v549 = vrot.slane %v359, %v548
    %v550 = vmul.f32 %v113, %v549
    %v551 = vadd.f32 %v545, %v550
    %v552 = vlaneseq
    %v553 = vshrl.u32 %v552, 7
    %v554 = vsub.s32 4, %v553
    %v555 = vrot.slane %v359, %v554
    %v556 = vmul.f32 %v119, %v555
    %v557 = vadd.f32 %v551, %v556
    %v558 = vlaneseq
    %v559 = vshrl.u32 %v558, 7
    %v560 = vsub.s32 5, %v559
    %v561 = vrot.slane %v359, %v560
    %v562 = vmul.f32 %v125, %v561
    %v563 = vadd.f32 %v557, %v562
    %v564 = vlaneseq
    %v565 = vshrl.u32 %v564, 7
    %v566 = vsub.s32 6, %v565
    %v567 = vrot.slane %v359, %v566
    %v568 = vmul.f32 %v131, %v567
    %v569 = vadd.f32 %v563, %v568
    %v570 = vlaneseq
    %v571 = vshrl.u32 %v570, 7
    %v572 = vsub.s32 7, %v571
    %v573 = vrot.slane %v359, %v572
    %v574 = vmul.f32 %v137, %v573
    %v575 = vadd.f32 %v569, %v574
    %v576 = vmul.f32 %v575, %v495
    %v577 = vmul.f32 %v89, %v378
    %v578 = vlaneseq
    %v579 = vshrl.u32 %v578, 7
    %v580 = vsub.s32 0, %v579
    %v581 = vrot.slane %v378, %v580
    %v582 = vmul.f32 %v95, %v581
    %v583 = vadd.f32 %v577, %v582
    %v584 = vlaneseq
    %v585 = vshrl.u32 %v584, 7
    %v586 = vsub.s32 1, %v585
    %v587 = vrot.slane %v378, %v586
    %v588 = vmul.f32 %v101, %v587
    %v589 = vadd.f32 %v583, %v588
    %v590 = vlaneseq
    %v591 = vshrl.u32 %v590, 7
    %v592 = vsub.s32 2, %v591
    %v593 = vrot.slane %v378, %v592
    %v594 = vmul.f32 %v107, %v593
    %v595 = vadd.f32 %v589, %v594
    %v596 = vlaneseq
    %v597 = vshrl.u32 %v596, 7
    %v598 = vsub.s32 3, %v597
    %v599 = vrot.slane %v378, %v598
    %v600 = vmul.f32 %v113, %v599
    %v601 = vadd.f32 %v595, %v600
    %v602 = vlaneseq
    %v603 = vshrl.u32 %v602, 7
    %v604 = vsub.s32 4, %v603
    %v605 = vrot.slane %v378, %v604
    %v606 = vmul.f32 %v119, %v605
    %v607 = vadd.f32 %v601, %v606
    %v608 = vlaneseq
    %v609 = vshrl.u32 %v608, 7
    %v610 = vsub.s32 5, %v609
    %v611 = vrot.slane %v378, %v610
    %v612 = vmul.f32 %v125, %v611
    %v613 = vadd.f32 %v607, %v612
    %v614 = vlaneseq
    %v615 = vshrl.u32 %v614, 7
    %v616 = vsub.s32 6, %v615
    %v617 = vrot.slane %v378, %v616
    %v618 = vmul.f32 %v131, %v617
    %v619 = vadd.f32 %v613, %v618
    %v620 = vlaneseq
    %v621 = vshrl.u32 %v620, 7
    %v622 = vsub.s32 7, %v621
    %v623 = vrot.slane %v378, %v622
    %v624 = vmul.f32 %v137, %v623
    %v625 = vadd.f32 %v619, %v624
    %v626 = vmul.f32 %v625, %v498
    %v627 = vadd.f32 %v576, %v626
    %v628 = vmul.f32 %v89, %v397
    %v629 = vlaneseq
    %v630 = vshrl.u32 %v629, 7
    %v631 = vsub.s32 0, %v630
    %v632 = vrot.slane %v397, %v631
    %v633 = vmul.f32 %v95, %v632
    %v634 = vadd.f32 %v628, %v633
    %v635 = vlaneseq
    %v636 = vshrl.u32 %v635, 7
    %v637 = vsub.s32 1, %v636
    %v638 = vrot.slane %v397, %v637
    %v639 = vmul.f32 %v101, %v638
    %v640 = vadd.f32 %v634, %v639
    %v641 = vlaneseq
    %v642 = vshrl.u32 %v641, 7
    %v643 = vsub.s32 2, %v642
    %v644 = vrot.slane %v397, %v643
    %v645 = vmul.f32 %v107, %v644
    %v646 = vadd.f32 %v640, %v645
    %v647 = vlaneseq
    %v648 = vshrl.u32 %v647, 7
    %v649 = vsub.s32 3, %v648
    %v650 = vrot.slane %v397, %v649
    %v651 = vmul.f32 %v113, %v650
    %v652 = vadd.f32 %v646, %v651
    %v653 = vlaneseq
    %v654 = vshrl.u32 %v653, 7
    %v655 = vsub.s32 4, %v654
    %v656 = vrot.slane %v397, %v655
    %v657 = vmul.f32 %v119, %v656
    %v658 = vadd.f32 %v652, %v657
    %v659 = vlaneseq
    %v660 = vshrl.u32 %v659, 7
    %v661 = vsub.s32 5, %v660
    %v662 = vrot.slane %v397, %v661
    %v663 = vmul.f32 %v125, %v662
    %v664 = vadd.f32 %v658, %v663
    %v665 = vlaneseq
    %v666 = vshrl.u32 %v665, 7
    %v667 = vsub.s32 6, %v666
    %v668 = vrot.slane %v397, %v667
    %v669 = vmul.f32 %v131, %v668
    %v670 = vadd.f32 %v664, %v669
    %v671 = vlaneseq
    %v672 = vshrl.u32 %v671, 7
    %v673 = vsub.s32 7, %v672
    %v674 = vrot.slane %v397, %v673
    %v675 = vmul.f32 %v137, %v674
    %v676 = vadd.f32 %v670, %v675
    %v677 = vmul.f32 %v676, %v502
    %v678 = vadd.f32 %v627, %v677
    %v679 = vmul.f32 %v89, %v416
    %v680 = vlaneseq
    %v681 = vshrl.u32 %v680, 7
    %v682 = vsub.s32 0, %v681
    %v683 = vrot.slane %v416, %v682
    %v684 = vmul.f32 %v95, %v683
    %v685 = vadd.f32 %v679, %v684
    %v686 = vlaneseq
    %v687 = vshrl.u32 %v686, 7
    %v688 = vsub.s32 1, %v687
    %v689 = vrot.slane %v416, %v688
    %v690 = vmul.f32 %v101, %v689
    %v691 = vadd.f32 %v685, %v690
    %v692 = vlaneseq
    %v693 = vshrl.u32 %v692, 7
    %v694 = vsub.s32 2, %v693
    %v695 = vrot.slane %v416, %v694
    %v696 = vmul.f32 %v107, %v695
    %v697 = vadd.f32 %v691, %v696
    %v698 = vlaneseq
    %v699 = vshrl.u32 %v698, 7
    %v700 = vsub.s32 3, %v699
    %v701 = vrot.slane %v416, %v700
    %v702 = vmul.f32 %v113, %v701
    %v703 = vadd.f32 %v697, %v702
    %v704 = vlaneseq
    %v705 = vshrl.u32 %v704, 7
    %v706 = vsub.s32 4, %v705
    %v707 = vrot.slane %v416, %v706
    %v708 = vmul.f32 %v119, %v707
    %v709 = vadd.f32 %v703, %v708
    %v710 = vlaneseq
    %v711 = vshrl.u32 %v710, 7
    %v712 = vsub.s32 5, %v711
    %v713 = vrot.slane %v416, %v712
    %v714 = vmul.f32 %v125, %v713
    %v715 = vadd.f32 %v709, %v714
    %v716 = vlaneseq
    %v717 = vshrl.u32 %v716, 7
    %v718 = vsub.s32 6, %v717
    %v719 = vrot.slane %v416, %v718
    %v720 = vmul.f32 %v131, %v719
    %v721 = vadd.f32 %v715, %v720
    %v722 = vlaneseq
    %v723 = vshrl.u32 %v722, 7
    %v724 = vsub.s32 7, %v723
    %v725 = vrot.slane %v416, %v724
    %v726 = vmul.f32 %v137, %v725
    %v727 = vadd.f32 %v721, %v726
    %v728 = vmul.f32 %v727, %v506
    %v729 = vadd.f32 %v678, %v728
    %v730 = vmul.f32 %v89, %v435
    %v731 = vlaneseq
    %v732 = vshrl.u32 %v731, 7
    %v733 = vsub.s32 0, %v732
    %v734 = vrot.slane %v435, %v733
    %v735 = vmul.f32 %v95, %v734
    %v736 = vadd.f32 %v730, %v735
    %v737 = vlaneseq
    %v738 = vshrl.u32 %v737, 7
    %v739 = vsub.s32 1, %v738
    %v740 = vrot.slane %v435, %v739
    %v741 = vmul.f32 %v101, %v740
    %v742 = vadd.f32 %v736, %v741
    %v743 = vlaneseq
    %v744 = vshrl.u32 %v743, 7
    %v745 = vsub.s32 2, %v744
    %v746 = vrot.slane %v435, %v745
    %v747 = vmul.f32 %v107, %v746
    %v748 = vadd.f32 %v742, %v747
    %v749 = vlaneseq
    %v750 = vshrl.u32 %v749, 7
    %v751 = vsub.s32 3, %v750
    %v752 = vrot.slane %v435, %v751
    %v753 = vmul.f32 %v113, %v752
    %v754 = vadd.f32 %v748, %v753
    %v755 = vlaneseq
    %v756 = vshrl.u32 %v755, 7
    %v757 = vsub.s32 4, %v756
    %v758 = vrot.slane %v435, %v757
    %v759 = vmul.f32 %v119, %v758
    %v760 = vadd.f32 %v754, %v759
    %v761 = vlaneseq
    %v762 = vshrl.u32 %v761, 7
    %v763 = vsub.s32 5, %v762
    %v764 = vrot.slane %v435, %v763
    %v765 = vmul.f32 %v125, %v764
    %v766 = vadd.f32 %v760, %v765
    %v767 = vlaneseq
    %v768 = vshrl.u32 %v767, 7
    %v769 = vsub.s32 6, %v768
    %v770 = vrot.slane %v435, %v769
    %v771 = vmul.f32 %v131, %v770
    %v772 = vadd.f32 %v766, %v771
    %v773 = vlaneseq
    %v774 = vshrl.u32 %v773, 7
    %v775 = vsub.s32 7, %v774
    %v776 = vrot.slane %v435, %v775
    %v777 = vmul.f32 %v137, %v776
    %v778 = vadd.f32 %v772, %v777
    %v779 = vmul.f32 %v778, %v510
    %v780 = vadd.f32 %v729, %v779
    %v781 = vmul.f32 %v89, %v454
    %v782 = vlaneseq
    %v783 = vshrl.u32 %v782, 7
    %v784 = vsub.s32 0, %v783
    %v785 = vrot.slane %v454, %v784
    %v786 = vmul.f32 %v95, %v785
    %v787 = vadd.f32 %v781, %v786
    %v788 = vlaneseq
    %v789 = vshrl.u32 %v788, 7
    %v790 = vsub.s32 1, %v789
    %v791 = vrot.slane %v454, %v790
    %v792 = vmul.f32 %v101, %v791
    %v793 = vadd.f32 %v787, %v792
    %v794 = vlaneseq
    %v795 = vshrl.u32 %v794, 7
    %v796 = vsub.s32 2, %v795
    %v797 = vrot.slane %v454, %v796
    %v798 = vmul.f32 %v107, %v797
    %v799 = vadd.f32 %v793, %v798
    %v800 = vlaneseq
    %v801 = vshrl.u32 %v800, 7
    %v802 = vsub.s32 3, %v801
    %v803 = vrot.slane %v454, %v802
    %v804 = vmul.f32 %v113, %v803
    %v805 = vadd.f32 %v799, %v804
    %v806 = vlaneseq
    %v807 = vshrl.u32 %v806, 7
    %v808 = vsub.s32 4, %v807
    %v809 = vrot.slane %v454, %v808
    %v810 = vmul.f32 %v119, %v809
    %v811 = vadd.f32 %v805, %v810
    %v812 = vlaneseq
    %v813 = vshrl.u32 %v812, 7
    %v814 = vsub.s32 5, %v813
    %v815 = vrot.slane %v454, %v814
    %v816 = vmul.f32 %v125, %v815
    %v817 = vadd.f32 %v811, %v816
    %v818 = vlaneseq
    %v819 = vshrl.u32 %v818, 7
    %v820 = vsub.s32 6, %v819
    %v821 = vrot.slane %v454, %v820
    %v822 = vmul.f32 %v131, %v821
    %v823 = vadd.f32 %v817, %v822
    %v824 = vlaneseq
    %v825 = vshrl.u32 %v824, 7
    %v826 = vsub.s32 7, %v825
    %v827 = vrot.slane %v454, %v826
    %v828 = vmul.f32 %v137, %v827
    %v829 = vadd.f32 %v823, %v828
    %v830 = vmul.f32 %v829, %v514
    %v831 = vadd.f32 %v780, %v830
    %v832 = vmul.f32 %v89, %v473
    %v833 = vlaneseq
    %v834 = vshrl.u32 %v833, 7
    %v835 = vsub.s32 0, %v834
    %v836 = vrot.slane %v473, %v835
    %v837 = vmul.f32 %v95, %v836
    %v838 = vadd.f32 %v832, %v837
    %v839 = vlaneseq
    %v840 = vshrl.u32 %v839, 7
    %v841 = vsub.s32 1, %v840
    %v842 = vrot.slane %v473, %v841
    %v843 = vmul.f32 %v101, %v842
    %v844 = vadd.f32 %v838, %v843
    %v845 = vlaneseq
    %v846 = vshrl.u32 %v845, 7
    %v847 = vsub.s32 2, %v846
    %v848 = vrot.slane %v473, %v847
    %v849 = vmul.f32 %v107, %v848
    %v850 = vadd.f32 %v844, %v849
    %v851 = vlaneseq
    %v852 = vshrl.u32 %v851, 7
    %v853 = vsub.s32 3, %v852
    %v854 = vrot.slane %v473, %v853
    %v855 = vmul.f32 %v113, %v854
    %v856 = vadd.f32 %v850, %v855
    %v857 = vlaneseq
    %v858 = vshrl.u32 %v857, 7
    %v859 = vsub.s32 4, %v858
    %v860 = vrot.slane %v473, %v859
    %v861 = vmul.f32 %v119, %v860
    %v862 = vadd.f32 %v856, %v861
    %v863 = vlaneseq
    %v864 = vshrl.u32 %v863, 7
    %v865 = vsub.s32 5, %v864
    %v866 = vrot.slane %v473, %v865
    %v867 = vmul.f32 %v125, %v866
    %v868 = vadd.f32 %v862, %v867
    %v869 = vlaneseq
    %v870 = vshrl.u32 %v869, 7
    %v871 = vsub.s32 6, %v870
    %v872 = vrot.slane %v473, %v871
    %v873 = vmul.f32 %v131, %v872
    %v874 = vadd.f32 %v868, %v873
    %v875 = vlaneseq
    %v876 = vshrl.u32 %v875, 7
    %v877 = vsub.s32 7, %v876
    %v878 = vrot.slane %v473, %v877
    %v879 = vmul.f32 %v137, %v878
    %v880 = vadd.f32 %v874, %v879
    %v881 = vmul.f32 %v880, %v518
    %v882 = vadd.f32 %v831, %v881
    %v883 = vmul.f32 %v89, %v492
    %v884 = vlaneseq
    %v885 = vshrl.u32 %v884, 7
    %v886 = vsub.s32 0, %v885
    %v887 = vrot.slane %v492, %v886
    %v888 = vmul.f32 %v95, %v887
    %v889 = vadd.f32 %v883, %v888
    %v890 = vlaneseq
    %v891 = vshrl.u32 %v890, 7
    %v892 = vsub.s32 1, %v891
    %v893 = vrot.slane %v492, %v892
    %v894 = vmul.f32 %v101, %v893
    %v895 = vadd.f32 %v889, %v894
    %v896 = vlaneseq
    %v897 = vshrl.u32 %v896, 7
    %v898 = vsub.s32 2, %v897
    %v899 = vrot.slane %v492, %v898
    %v900 = vmul.f32 %v107, %v899
    %v901 = vadd.f32 %v895, %v900
    %v902 = vlaneseq
    %v903 = vshrl.u32 %v902, 7
    %v904 = vsub.s32 3, %v903
    %v905 = vrot.slane %v492, %v904
    %v906 = vmul.f32 %v113, %v905
    %v907 = vadd.f32 %v901, %v906
    %v908 = vlaneseq
    %v909 = vshrl.u32 %v908, 7
    %v910 = vsub.s32 4, %v909
    %v911 = vrot.slane %v492, %v910
    %v912 = vmul.f32 %v119, %v911
    %v913 = vadd.f32 %v907, %v912
    %v914 = vlaneseq
    %v915 = vshrl.u32 %v914, 7
    %v916 = vsub.s32 5, %v915
    %v917 = vrot.slane %v492, %v916
    %v918 = vmul.f32 %v125, %v917
    %v919 = vadd.f32 %v913, %v918
    %v920 = vlaneseq
    %v921 = vshrl.u32 %v920, 7
    %v922 = vsub.s32 6, %v921
    %v923 = vrot.slane %v492, %v922
    %v924 = vmul.f32 %v131, %v923
    %v925 = vadd.f32 %v919, %v924
    %v926 = vlaneseq
    %v927 = vshrl.u32 %v926, 7
    %v928 = vsub.s32 7, %v927
    %v929 = vrot.slane %v492, %v928
    %v930 = vmul.f32 %v137, %v929
    %v931 = vadd.f32 %v925, %v930
    %v932 = vmul.f32 %v931, %v522
    %v933 = vadd.f32 %v882, %v932
    %v934 = vadd.f32 %v933, %v525
    %v935 = vld [vmem:[%s5] sm:$0xff]
    %v936 = vmul.f32 %v934, 1.442695
    %v937 = vpow.pop %v936
    %939 = vset.pattern.permute.xlu0 0
    %940 = vperm.xlu0 %939, %v935
    %v941 = vpop.permute.xlu0 %940
    %v943 = vmul.f32 %v941, %v937
    %v944 = vadd.f32 %v526, %v943
    %v945 = vlaneseq
    %v946 = vshrl.u32 %v945, 7
    %v947 = vsub.s32 0, %v946
    %v948 = vrot.slane %v944, %v947
    %v949 = vmul.f32 %v948, %v944
    %v950 = vxor.u32 %v949, 2147483648
    %v951 = vmul.f32 %v950, 1.442695
    %v952 = vpow.pop %v951
    %v953 = vadd.f32 %v952, 1.0
    %v954 = vrcp.pop %v953
    %v955 = vmul.f32 1.0, %v954
    %v956 = vlaneseq
    %v957 = vshrl.u32 %v956, 7
    %v958 = vsub.s32 1, %v957
    %v959 = vrot.slane %v944, %v958
    %v960 = vmul.f32 %v959, %v944
    %v961 = vxor.u32 %v960, 2147483648
    %v962 = vmul.f32 %v961, 1.442695
    %v963 = vpow.pop %v962
    %v964 = vadd.f32 %v963, 1.0
    %v965 = vrcp.pop %v964
    %v966 = vmul.f32 1.0, %v965
    %v967 = vlaneseq
    %v968 = vshrl.u32 %v967, 7
    %v969 = vsub.s32 2, %v968
    %v970 = vrot.slane %v944, %v969
    %v971 = vmul.f32 %v970, %v944
    %v972 = vxor.u32 %v971, 2147483648
    %v973 = vmul.f32 %v972, 1.442695
    %v974 = vpow.pop %v973
    %v975 = vadd.f32 %v974, 1.0
    %v976 = vrcp.pop %v975
    %v977 = vmul.f32 1.0, %v976
    %v978 = vlaneseq
    %v979 = vshrl.u32 %v978, 7
    %v980 = vsub.s32 3, %v979
    %v981 = vrot.slane %v944, %v980
    %v982 = vmul.f32 %v981, %v944
    %v983 = vxor.u32 %v982, 2147483648
    %v984 = vmul.f32 %v983, 1.442695
    %v985 = vpow.pop %v984
    %v986 = vadd.f32 %v985, 1.0
    %v987 = vrcp.pop %v986
    %v988 = vmul.f32 1.0, %v987
    %v989 = vlaneseq
    %v990 = vshrl.u32 %v989, 7
    %v991 = vsub.s32 4, %v990
    %v992 = vrot.slane %v944, %v991
    %v993 = vmul.f32 %v992, %v944
    %v994 = vxor.u32 %v993, 2147483648
    %v995 = vmul.f32 %v994, 1.442695
    %v996 = vpow.pop %v995
    %v997 = vadd.f32 %v996, 1.0
    %v998 = vrcp.pop %v997
    %v999 = vmul.f32 1.0, %v998
    %v1000 = vlaneseq
    %v1001 = vshrl.u32 %v1000, 7
    %v1002 = vsub.s32 5, %v1001
    %v1003 = vrot.slane %v944, %v1002
    %v1004 = vmul.f32 %v1003, %v944
    %v1005 = vxor.u32 %v1004, 2147483648
    %v1006 = vmul.f32 %v1005, 1.442695
    %v1007 = vpow.pop %v1006
    %v1008 = vadd.f32 %v1007, 1.0
    %v1009 = vrcp.pop %v1008
    %v1010 = vmul.f32 1.0, %v1009
    %v1011 = vlaneseq
    %v1012 = vshrl.u32 %v1011, 7
    %v1013 = vsub.s32 6, %v1012
    %v1014 = vrot.slane %v944, %v1013
    %v1015 = vmul.f32 %v1014, %v944
    %v1016 = vxor.u32 %v1015, 2147483648
    %v1017 = vmul.f32 %v1016, 1.442695
    %v1018 = vpow.pop %v1017
    %v1019 = vadd.f32 %v1018, 1.0
    %v1020 = vrcp.pop %v1019
    %v1021 = vmul.f32 1.0, %v1020
    %v1022 = vlaneseq
    %v1023 = vshrl.u32 %v1022, 7
    %v1024 = vsub.s32 7, %v1023
    %v1025 = vrot.slane %v944, %v1024
    %v1026 = vmul.f32 %v1025, %v944
    %v1027 = vxor.u32 %v1026, 2147483648
    %v1028 = vmul.f32 %v1027, 1.442695
    %v1029 = vpow.pop %v1028
    %v1030 = vadd.f32 %v1029, 1.0
    %v1031 = vrcp.pop %v1030
    %v1032 = vmul.f32 1.0, %v1031
    %vm1033 = vcmask 15360
    %1034 = vst.msk [vmem:[%s7] sm:$0xff] %vm1033, %v955
    %1035 = vst.msk [vmem:[%s7 + $0x8] sm:$0xff] %vm1033, %v966
    %1036 = vst.msk [vmem:[%s7 + $0x10] sm:$0xff] %vm1033, %v977
    %1037 = vst.msk [vmem:[%s7 + $0x18] sm:$0xff] %vm1033, %v988
    %1038 = vst.msk [vmem:[%s7 + $0x20] sm:$0xff] %vm1033, %v999
    %1039 = vst.msk [vmem:[%s7 + $0x28] sm:$0xff] %vm1033, %v1010
    %1040 = vst.msk [vmem:[%s7 + $0x30] sm:$0xff] %vm1033, %v1021
    %1041 = vst.msk [vmem:[%s7 + $0x38] sm:$0xff] %vm1033, %v1032
    %1042 = vst.msk [vmem:[%s8] sm:$0xff] %vm1033, %v526
    %1043 = vst.msk [vmem:[%s8 + $0x8] sm:$0xff] %vm1033, %v934
    %1044 = vst.msk [vmem:[%s8 + $0x10] sm:$0xff] %vm1033, %v944
    // Predicated region
    $region42: #{tpu_custom_call.1} parent=1 // pred_check
      _
    $region43: #{tpu_custom_call.1} parent=1 // pred_check_branch
      %1046 = sbr.rel (0) target = $region45
    $region44: #{tpu_custom_call.1} parent=1 // pred_region
      _
    $region45: #{tpu_custom_call.1} parent=1 // pred_fallthru
      _
    // Predicated region
    $region46: #{tpu_custom_call.1} parent=1 // pred_check
      _
    $region47: #{tpu_custom_call.1} parent=1 // pred_check_branch
      %1048 = sbr.rel (0) target = $region49
    $region48: #{tpu_custom_call.1} parent=1 // pred_region
      _
    $region49: #{tpu_custom_call.1} parent=1 // pred_fallthru
      _
    // Predicated region
    $region50: #{tpu_custom_call.1} parent=1 // pred_check
      _
    $region51: #{tpu_custom_call.1} parent=1 // pred_check_branch
      %1050 = sbr.rel (0) target = $region53
    $region52: #{tpu_custom_call.1} parent=1 // pred_region
      _
    $region53: #{tpu_custom_call.1} parent=1 // pred_fallthru
      _
    // Predicated region
    $region54: #{tpu_custom_call.1} parent=1 // pred_check
      _
    $region55: #{tpu_custom_call.1} parent=1 // pred_check_branch
      %1052 = sbr.rel (0) target = $region57
    $region56: #{tpu_custom_call.1} parent=1 // pred_region
      _
    $region57: #{tpu_custom_call.1} parent=1 // pred_fallthru
      _
    %1053 = vsyncpa [#allocation4], 1
    %1054 = vsyncpa [#allocation6], 1

</llo_original>
